<compile_context>
chip_gen: v7x
topology: tpu7x:2x2x1
jax: 0.10.0
libtpu: 0.0.40
codegen_flags: <defaults>
</compile_context>

<pallas_src>
import jax
import jax.numpy as jnp
from jax import lax
from jax.experimental import pallas as pl
from jax.experimental.pallas import tpu as pltpu

LANE = 128


def _round_up(a, b):
    return (a + b - 1) // b * b


def _vmem_limit_bytes():
    """Generation-aware VMEM limit (v7x has 64 MiB physical, v5e/v6e 128 MiB)."""
    try:
        cap = int(pltpu.get_tpu_info().vmem_capacity_bytes)
    except Exception:
        cap = 64 * 1024 * 1024
    return max(32 * 1024 * 1024, min(int(cap * 0.6), 96 * 1024 * 1024))


_VMEM_LIMIT = _vmem_limit_bytes()


def _pick_th(H, W, cin_p, cout_p, n_batch, vmem_limit):
    """Largest even divisor of H whose strip blocks fit a VMEM budget while
    keeping at least ~4 grid steps (helps v7x's 2 TensorCores)."""
    budget = max(vmem_limit // 8, 1 << 20)
    cands = [t for t in range(2, H + 1, 2) if H % t == 0]
    assert cands, "H must have an even divisor >= 2"

    def step_bytes(t):   # double-buffered bf16 input strip + f32 output strip
        return 2 * t * W * (cin_p * 2 + cout_p * 4)

    fitting = [t for t in cands if step_bytes(t) <= budget] or [cands[0]]
    pref = [t for t in fitting if n_batch * (H // t) >= 4] or fitting
    return max(pref)


# ----------------------------------------------------------------------------
# Shared conv body: 3x3 conv (stride 1, pad 1) + folded-BN bias + ReLU, one strip
# ----------------------------------------------------------------------------
def _conv_body(x_ref, top_ref, bot_ref, w_ref, b_ref):
    # x_ref   : (TH, W, Cin)        bf16  row strip of the input feature map
    # top_ref : (W, Cin)            bf16  row just above the strip (clamped read)
    # bot_ref : (W, Cin)            bf16  row just below the strip (clamped read)
    # w_ref   : (3*Cin, 3*Cout)     bf16  [kh*Cin+ci, kw*Cout+co], BN folded in
    # b_ref   : (1, Cout)           f32   folded bias
    # returns : (TH, W, Cout)       f32   ReLU(conv + bias)
    TH, W, Cin = x_ref.shape
    Cout = w_ref.shape[1] // 3

    h = pl.program_id(1)
    nh = pl.num_programs(1)

    xm = x_ref[...]
    tv = top_ref[...]
    bv = bot_ref[...]
    # Mask the halo rows at the image borders (pad = 1 along H).
    top = jnp.where(h > 0, tv, jnp.zeros_like(tv)).reshape(1, W, Cin)
    bot = jnp.where(h < nh - 1, bv, jnp.zeros_like(bv)).reshape(1, W, Cin)

    # Row-shifted slabs (leading-dim slices are cheap), concatenated on the lane
    # (channel) axis so the MXU sees a single K = 3*Cin contraction.
    r0 = jnp.concatenate([top, xm[:TH - 1]], axis=0)      # rows h-1 (kh = 0)
    r2 = jnp.concatenate([xm[1:], bot], axis=0)           # rows h+1 (kh = 2)
    patch = jnp.concatenate([r0, xm, r2], axis=-1)        # (TH, W, 3*Cin)

    # One MXU matmul covering all three kw taps in the N dimension (3*Cout).
    y = jnp.dot(patch.reshape(TH * W, 3 * Cin), w_ref[...],
                preferred_element_type=jnp.float32).reshape(TH, W, 3 * Cout)
    y0 = y[:, :, :Cout]            # kw = 0 (left tap)   -- lane slices at
    y1 = y[:, :, Cout:2 * Cout]    # kw = 1 (center)        128-column
    y2 = y[:, :, 2 * Cout:]        # kw = 2 (right tap)     boundaries (free)

    # kw taps: shift along W with a zero column at the image border (pad = 1
    # along W).  Accumulate into a single live f32 tile.
    zcol = jnp.zeros((TH, 1, Cout), jnp.float32)
    acc = y1 + b_ref[...]
    acc = acc + jnp.concatenate([zcol, y0[:, :W - 1, :]], axis=1)
    acc = acc + jnp.concatenate([y2[:, 1:, :], zcol], axis=1)
    return jnp.maximum(acc, 0.0)


def _conv_bn_relu_kernel(x_ref, top_ref, bot_ref, w_ref, b_ref, o_ref):
    o_ref[...] = _conv_body(x_ref, top_ref, bot_ref, w_ref, b_ref).astype(o_ref.dtype)


# ----------------------------------------------------------------------------
# Fused last conv + 2x2 max-pool (stride 2, return_indices, PyTorch flat h*W+w)
# ----------------------------------------------------------------------------
def _conv_bn_relu_pool_kernel(x_ref, top_ref, bot_ref, w_ref, b_ref,
                              v_ref, i_ref, act_ref):
    # v_ref  : (TH//2, W//2, Cout) f32 pooled values
    # i_ref  : (TH//2, W//2, Cout) int32 flat argmax indices (h*W + w)
    # act_ref: (TH, W, Cout) f32 VMEM scratch -- pre-pool activation never hits HBM
    act_ref[...] = _conv_body(x_ref, top_ref, bot_ref, w_ref, b_ref)

    TH, W, _ = x_ref.shape
    Cout = v_ref.shape[-1]
    Ho, Wo = TH // 2, W // 2
    row_base = pl.program_id(1) * TH

    # Stride-2 column downsample straight from the VMEM scratch ref (native
    # strided vld); row pairing via a free leading-dim reshape.
    xe = act_ref[:, pl.ds(0, Wo, 2), :].reshape(Ho, 2, Wo, Cout)   # even columns
    xo = act_ref[:, pl.ds(1, Wo, 2), :].reshape(Ho, 2, Wo, Cout)   # odd columns
    v00, v10 = xe[:, 0], xe[:, 1]
    v01, v11 = xo[:, 0], xo[:, 1]

    # Window order (0,0),(0,1),(1,0),(1,1); strict ">" keeps the first
    # occurrence.  Track only a small scalar offset per candidate.
    best_v = v00
    best_o = jnp.zeros((Ho, Wo, Cout), jnp.int32)
    for v, off in ((v01, 1), (v10, W), (v11, W + 1)):
        take = v > best_v
        best_v = jnp.where(take, v, best_v)
        best_o = jnp.where(take, off, best_o)

    row = lax.broadcasted_iota(jnp.int32, (Ho, Wo, 1), 0)
    col = lax.broadcasted_iota(jnp.int32, (Ho, Wo, 1), 1)
    base = (row_base + 2 * row) * W + 2 * col            # flat index of (0,0) tap

    v_ref[...] = best_v.astype(v_ref.dtype)
    i_ref[...] = base + best_o


# ----------------------------------------------------------------------------
# Wrappers
# ----------------------------------------------------------------------------
def _conv_specs(th, H, W, Cin, Cout):
    def strip_map(n, h):
        return (n, h, 0, 0)

    def top_map(n, h):   # row just above the strip, clamped (masked in-kernel)
        return (n, jnp.maximum(h * th - 1, 0), 0, 0)

    def bot_map(n, h):   # row just below the strip, clamped (masked in-kernel)
        return (n, jnp.minimum(h * th + th, H - 1), 0, 0)

    in_specs = [
        pl.BlockSpec((None, th, W, Cin), strip_map),
        pl.BlockSpec((None, None, W, Cin), top_map),
        pl.BlockSpec((None, None, W, Cin), bot_map),
        pl.BlockSpec((3 * Cin, 3 * Cout), lambda n, h: (0, 0)),
        pl.BlockSpec((1, Cout), lambda n, h: (0, 0)),
    ]
    return in_specs, strip_map


def conv_bn_relu(x, w_cat, bias, *, th, out_dtype):
    """x: (N,H,W,Cin) bf16 -> (N,H,W,Cout) out_dtype (Cin/Cout lane-padded)."""
    N, H, W, Cin = x.shape
    Cout = w_cat.shape[1] // 3
    assert H % th == 0 and w_cat.shape == (3 * Cin, 3 * Cout)
    nh = H // th
    in_specs, strip_map = _conv_specs(th, H, W, Cin, Cout)
    return pl.pallas_call(
        _conv_bn_relu_kernel,
        out_shape=jax.ShapeDtypeStruct((N, H, W, Cout), out_dtype),
        grid=(N, nh),
        in_specs=in_specs,
        out_specs=pl.BlockSpec((None, th, W, Cout), strip_map),
        compiler_params=pltpu.CompilerParams(
            dimension_semantics=("parallel", "parallel"),
            vmem_limit_bytes=_VMEM_LIMIT),
    )(x, x, x, w_cat, bias)


def conv_bn_relu_pool(x, w_cat, bias, *, th):
    """Last conv + fused 2x2 max-pool with indices.  Returns (pooled, indices)."""
    N, H, W, Cin = x.shape
    Cout = w_cat.shape[1] // 3
    assert H % th == 0 and th % 2 == 0 and W % 2 == 0
    assert w_cat.shape == (3 * Cin, 3 * Cout)
    nh = H // th
    Ho, Wo = H // 2, W // 2
    tho = th // 2
    in_specs, _ = _conv_specs(th, H, W, Cin, Cout)
    out_map = lambda n, h: (n, h, 0, 0)
    return pl.pallas_call(
        _conv_bn_relu_pool_kernel,
        out_shape=(jax.ShapeDtypeStruct((N, Ho, Wo, Cout), jnp.float32),
                   jax.ShapeDtypeStruct((N, Ho, Wo, Cout), jnp.int32)),
        grid=(N, nh),
        in_specs=in_specs,
        out_specs=(pl.BlockSpec((None, tho, Wo, Cout), out_map),
                   pl.BlockSpec((None, tho, Wo, Cout), out_map)),
        scratch_shapes=[pltpu.VMEM((th, W, Cout), jnp.float32)],
        compiler_params=pltpu.CompilerParams(
            dimension_semantics=("parallel", "parallel"),
            vmem_limit_bytes=_VMEM_LIMIT),
    )(x, x, x, w_cat, bias)


# ----------------------------------------------------------------------------
# Parameter construction (deterministic, synthetic) and full encoder forward.
# ----------------------------------------------------------------------------
def make_encoder_params(key, n_in_feat, n_out_feat, n_blocks=2):
    """Returns a list of (conv_w[3,3,Cin,Cout], bn_scale[Cout], folded_bias[Cout])."""
    channels = [n_in_feat] + [n_out_feat] * n_blocks
    eps = 1e-5
    params = []
    for i in range(n_blocks):
        cin, cout = channels[i], channels[i + 1]
        key, kw, kb, kg, kbe = jax.random.split(key, 5)
        w = 0.1 * jax.random.normal(kw, (3, 3, cin, cout), jnp.float32)
        conv_b = 0.1 * jax.random.normal(kb, (cout,), jnp.float32)
        gamma = 1.0 + 0.1 * jax.random.normal(kg, (cout,), jnp.float32)
        beta = 0.1 * jax.random.normal(kbe, (cout,), jnp.float32)
        run_mean = jnp.zeros((cout,), jnp.float32)
        run_var = jnp.ones((cout,), jnp.float32)
        scale = gamma / jnp.sqrt(run_var + eps)             # eval-mode BN
        bias = beta + (conv_b - run_mean) * scale
        params.append((w, scale, bias))
    return params


def prep_encoder_params(raw_params, n_in_feat):
    """Fold BN scale into the conv weights, pad channels to the 128-lane width,
    reorder weights to (3*CinP, 3*CoutP) [kh*Cin+ci, kw*Cout+co] and cast bf16."""
    prepped = []
    cin_p = _round_up(n_in_feat, LANE)
    for (w, scale, bias) in raw_params:
        _, _, cin, cout = w.shape
        cout_p = _round_up(cout, LANE)
        wf = w * scale[None, None, None, :]                 # conv(x,w)*s == conv(x,w*s)
        wp = jnp.zeros((3, 3, cin_p, cout_p), jnp.float32)
        wp = wp.at[:, :, :cin, :cout].set(wf)               # (kh, kw, ci, co)
        w_cat = jnp.transpose(wp, (0, 2, 1, 3)).reshape(3 * cin_p, 3 * cout_p)
        w_cat = w_cat.astype(jnp.bfloat16)
        b_p = jnp.zeros((1, cout_p), jnp.float32).at[0, :cout].set(bias)
        prepped.append((w_cat, b_p))
        cin_p = cout_p
    return prepped


def encoder_forward(x_nchw, prepped, n_out_feat, *, th=None):
    """Mirror of _Encoder.forward: returns ((pooled, indices), output_size)."""
    N, C_in, H, W = x_nchw.shape
    assert H % 2 == 0 and W % 2 == 0
    cin_p = prepped[0][0].shape[0] // 3
    cout_p = prepped[-1][0].shape[1] // 3
    x = jnp.transpose(x_nchw, (0, 2, 3, 1)).astype(jnp.float32)      # NCHW -> NHWC
    x = jnp.pad(x, ((0, 0), (0, 0), (0, 0), (0, cin_p - C_in))).astype(jnp.bfloat16)
    if th is None:
        th = _pick_th(H, W, cin_p, cout_p, N, _VMEM_LIMIT)
    # All but the last block: conv+BN+ReLU, bf16 activations.
    for (w_cat, b_p) in prepped[:-1]:
        x = conv_bn_relu(x, w_cat, b_p, th=th, out_dtype=jnp.bfloat16)
    # Last block: conv+BN+ReLU fused with the 2x2 max-pool (+indices).
    w_cat, b_p = prepped[-1]
    pooled, indices = conv_bn_relu_pool(x, w_cat, b_p, th=th)
    pooled = pooled[..., :n_out_feat]                                # drop lane padding
    indices = indices[..., :n_out_feat]
    output_size = (N, n_out_feat, H, W)                              # pre-pool size, NCHW
    pooled_nchw = jnp.transpose(pooled, (0, 3, 1, 2))
    indices_nchw = jnp.transpose(indices, (0, 3, 1, 2))
    return (pooled_nchw, indices_nchw), output_size


# ----------------------------------------------------------------------------
# Pure-JAX reference (mimics the kernel's bf16-in / f32-accumulate pipeline).
# ----------------------------------------------------------------------------
def _reference_pool(y):
    N, H, W, C = y.shape
    Ho, Wo = H // 2, W // 2
    yr = y.reshape(N, Ho, 2, Wo, 2, C)
    row = 2 * jnp.arange(Ho, dtype=jnp.int32).reshape(1, Ho, 1, 1)
    col = 2 * jnp.arange(Wo, dtype=jnp.int32).reshape(1, 1, Wo, 1)
    best_v = yr[:, :, 0, :, 0, :]
    best_i = jnp.broadcast_to(row * W + col, best_v.shape)
    for dh in range(2):
        for dw in range(2):
            if dh == 0 and dw == 0:
                continue
            v = yr[:, :, dh, :, dw, :]
            idx = jnp.broadcast_to((row + dh) * W + (col + dw), v.shape)
            take = v > best_v
            best_v = jnp.where(take, v, best_v)
            best_i = jnp.where(take, idx, best_i)
    return best_v, best_i


def reference_encoder(x_nchw, raw_params):
    x = jnp.transpose(x_nchw, (0, 2, 3, 1))
    x = x.astype(jnp.bfloat16).astype(jnp.float32)
    n = len(raw_params)
    for li, (w, scale, bias) in enumerate(raw_params):
        wf = (w * scale[None, None, None, :]).astype(jnp.bfloat16).astype(jnp.float32)
        y = lax.conv_general_dilated(
            x, wf, (1, 1), "SAME",
            dimension_numbers=("NHWC", "HWIO", "NHWC"),
            precision=lax.Precision.HIGHEST)
        y = jnp.maximum(y + bias[None, None, None, :], 0.0)
        if li < n - 1:
            y = y.astype(jnp.bfloat16).astype(jnp.float32)
        x = y
    return _reference_pool(x)


if __name__ == "__main__":
    key = jax.random.PRNGKey(0)
    k_x, k_p = jax.random.split(key)

    N, C_in, H, W = 2, 4, 16, 16
    C_out, n_blocks = 8, 2

    x = jax.random.normal(k_x, (N, C_in, H, W), jnp.float32)
    raw_params = make_encoder_params(k_p, C_in, C_out, n_blocks)
    prepped = prep_encoder_params(raw_params, C_in)

    (pooled, indices), out_size = encoder_forward(x, prepped, C_out)
    pooled = jax.block_until_ready(pooled)
    indices = jax.block_until_ready(indices)

    assert pooled.shape == (N, C_out, H // 2, W // 2)
    assert indices.shape == (N, C_out, H // 2, W // 2)
    assert indices.dtype == jnp.int32
    assert out_size == (N, C_out, H, W)
    assert bool(jnp.all((indices >= 0) & (indices < H * W)))
    assert bool(jnp.all(pooled >= 0.0))

    ref_v, ref_i = reference_encoder(x, raw_params)
    ref_v = jnp.transpose(ref_v, (0, 3, 1, 2))
    ref_i = jnp.transpose(ref_i, (0, 3, 1, 2))
    assert bool(jnp.allclose(pooled, ref_v, atol=5e-2, rtol=5e-2)), (
        "max abs diff = %f" % float(jnp.max(jnp.abs(pooled - ref_v))))
    assert bool(jnp.all(indices == ref_i))

    print("KERNEL_OK")
</pallas_src>

<mosaic_0001>
module attributes {stable_mosaic.version = 11 : i64} {
  func.func @_conv_bn_relu_kernel(%arg0: i32, %arg1: i32, %arg2: memref<1x8x16x128xbf16, #tpu.memory_space<vmem>>, %arg3: memref<1x1x16x128xbf16, #tpu.memory_space<vmem>>, %arg4: memref<1x1x16x128xbf16, #tpu.memory_space<vmem>>, %arg5: memref<384x384xbf16, #tpu.memory_space<vmem>>, %arg6: memref<1x128xf32, #tpu.memory_space<vmem>>, %arg7: memref<1x8x16x128xbf16, #tpu.memory_space<vmem>>) attributes {dimension_semantics = [#tpu.dimension_semantics<parallel>, #tpu.dimension_semantics<parallel>], iteration_bounds = array<i64: 2, 2>, scalar_prefetch = 0 : i64, scratch_operands = 0 : i64, tpu.core_type = #tpu.core_type<tc>, window_params = [{transform_indices = @transform_0, window_bounds = array<i64: 1, 8, 16, 128>}, {transform_indices = @transform_1, window_bounds = array<i64: 1, 1, 16, 128>}, {transform_indices = @transform_2, window_bounds = array<i64: 1, 1, 16, 128>}, {pipeline_mode = #tpu.pipeline_mode<synchronous>, transform_indices = @transform_3, window_bounds = array<i64: 384, 384>}, {pipeline_mode = #tpu.pipeline_mode<synchronous>, transform_indices = @transform_4, window_bounds = array<i64: 1, 128>}, {transform_indices = @transform_5, window_bounds = array<i64: 1, 8, 16, 128>}]} {
    %c0 = arith.constant 0 : index
    %c0_0 = arith.constant 0 : index
    %c0_1 = arith.constant 0 : index
    %c0_2 = arith.constant 0 : index
    %0 = vector.load %arg2[%c0, %c0_0, %c0_1, %c0_2] : memref<1x8x16x128xbf16, #tpu.memory_space<vmem>>, vector<1x8x16x128xbf16>
    %1 = vector.shape_cast %0 : vector<1x8x16x128xbf16> to vector<8x16x128xbf16>
    %c0_3 = arith.constant 0 : index
    %c0_4 = arith.constant 0 : index
    %c0_5 = arith.constant 0 : index
    %c0_6 = arith.constant 0 : index
    %2 = vector.load %arg3[%c0_3, %c0_4, %c0_5, %c0_6] : memref<1x1x16x128xbf16, #tpu.memory_space<vmem>>, vector<1x1x16x128xbf16>
    %3 = vector.shape_cast %2 : vector<1x1x16x128xbf16> to vector<16x128xbf16>
    %c0_7 = arith.constant 0 : index
    %c0_8 = arith.constant 0 : index
    %c0_9 = arith.constant 0 : index
    %c0_10 = arith.constant 0 : index
    %4 = vector.load %arg4[%c0_7, %c0_8, %c0_9, %c0_10] : memref<1x1x16x128xbf16, #tpu.memory_space<vmem>>, vector<1x1x16x128xbf16>
    %5 = vector.shape_cast %4 : vector<1x1x16x128xbf16> to vector<16x128xbf16>
    %c0_i32 = arith.constant 0 : i32
    %6 = arith.cmpi sgt, %arg1, %c0_i32 : i32
    %cst = arith.constant 0.000000e+00 : bf16
    %7 = vector.broadcast %cst : bf16 to vector<16x128xbf16>
    %8 = arith.select %6, %3, %7 : vector<16x128xbf16>
    %9 = vector.shape_cast %8 : vector<16x128xbf16> to vector<1x16x128xbf16>
    %c1_i32 = arith.constant 1 : i32
    %10 = arith.cmpi slt, %arg1, %c1_i32 : i32
    %cst_11 = arith.constant 0.000000e+00 : bf16
    %11 = vector.broadcast %cst_11 : bf16 to vector<16x128xbf16>
    %12 = arith.select %10, %5, %11 : vector<16x128xbf16>
    %13 = vector.shape_cast %12 : vector<16x128xbf16> to vector<1x16x128xbf16>
    %14 = vector.extract_strided_slice %1 {offsets = [0, 0, 0], sizes = [7, 16, 128], strides = [1, 1, 1]} : vector<8x16x128xbf16> to vector<7x16x128xbf16>
    %15 = tpu.concatenate %9, %14 in 0 : vector<1x16x128xbf16>, vector<7x16x128xbf16> -> vector<8x16x128xbf16>
    %16 = vector.extract_strided_slice %1 {offsets = [1, 0, 0], sizes = [7, 16, 128], strides = [1, 1, 1]} : vector<8x16x128xbf16> to vector<7x16x128xbf16>
    %17 = tpu.concatenate %16, %13 in 0 : vector<7x16x128xbf16>, vector<1x16x128xbf16> -> vector<8x16x128xbf16>
    %18 = tpu.concatenate %15, %1, %17 in 2 : vector<8x16x128xbf16>, vector<8x16x128xbf16>, vector<8x16x128xbf16> -> vector<8x16x384xbf16>
    %19 = vector.shape_cast %18 : vector<8x16x384xbf16> to vector<128x384xbf16>
    %c0_12 = arith.constant 0 : index
    %c0_13 = arith.constant 0 : index
    %20 = vector.load %arg5[%c0_12, %c0_13] : memref<384x384xbf16, #tpu.memory_space<vmem>>, vector<384x384xbf16>
    %cst_14 = arith.constant dense<0.000000e+00> : vector<128x384xf32>
    %21 = tpu.matmul %19, %20, %cst_14 {dimension_numbers = #tpu.dot_dimension_numbers<[1], [0], [0], [1], [0, 0, 1, 1], [], []>} : vector<128x384xbf16>, vector<384x384xbf16>, vector<128x384xf32> -> vector<128x384xf32>
    %22 = vector.shape_cast %21 : vector<128x384xf32> to vector<8x16x384xf32>
    %23 = vector.extract_strided_slice %22 {offsets = [0, 0, 0], sizes = [8, 16, 128], strides = [1, 1, 1]} : vector<8x16x384xf32> to vector<8x16x128xf32>
    %24 = vector.extract_strided_slice %22 {offsets = [0, 0, 128], sizes = [8, 16, 128], strides = [1, 1, 1]} : vector<8x16x384xf32> to vector<8x16x128xf32>
    %25 = vector.extract_strided_slice %22 {offsets = [0, 0, 256], sizes = [8, 16, 128], strides = [1, 1, 1]} : vector<8x16x384xf32> to vector<8x16x128xf32>
    %cst_15 = arith.constant 0.000000e+00 : f32
    %26 = vector.broadcast %cst_15 : f32 to vector<8x1x128xf32>
    %c0_16 = arith.constant 0 : index
    %c0_17 = arith.constant 0 : index
    %27 = vector.load %arg6[%c0_16, %c0_17] : memref<1x128xf32, #tpu.memory_space<vmem>>, vector<1x128xf32>
    %28 = vector.shape_cast %27 : vector<1x128xf32> to vector<1x1x128xf32>
    %29 = vector.broadcast %28 : vector<1x1x128xf32> to vector<8x16x128xf32>
    %30 = arith.addf %24, %29 : vector<8x16x128xf32>
    %31 = vector.extract_strided_slice %23 {offsets = [0, 0, 0], sizes = [8, 15, 128], strides = [1, 1, 1]} : vector<8x16x128xf32> to vector<8x15x128xf32>
    %32 = tpu.concatenate %26, %31 in 1 : vector<8x1x128xf32>, vector<8x15x128xf32> -> vector<8x16x128xf32>
    %33 = arith.addf %30, %32 : vector<8x16x128xf32>
    %34 = vector.extract_strided_slice %25 {offsets = [0, 1, 0], sizes = [8, 15, 128], strides = [1, 1, 1]} : vector<8x16x128xf32> to vector<8x15x128xf32>
    %35 = tpu.concatenate %34, %26 in 1 : vector<8x15x128xf32>, vector<8x1x128xf32> -> vector<8x16x128xf32>
    %36 = arith.addf %33, %35 : vector<8x16x128xf32>
    %cst_18 = arith.constant 0.000000e+00 : f32
    %37 = vector.broadcast %cst_18 : f32 to vector<8x16x128xf32>
    %38 = arith.maximumf %36, %37 : vector<8x16x128xf32>
    %39 = arith.truncf %38 : vector<8x16x128xf32> to vector<8x16x128xbf16>
    %c0_19 = arith.constant 0 : index
    %c0_20 = arith.constant 0 : index
    %c0_21 = arith.constant 0 : index
    %c0_22 = arith.constant 0 : index
    %40 = vector.load %arg7[%c0_19, %c0_20, %c0_21, %c0_22] : memref<1x8x16x128xbf16, #tpu.memory_space<vmem>>, vector<1x8x16x128xbf16>
    %41 = vector.shape_cast %40 : vector<1x8x16x128xbf16> to vector<8x16x128xbf16>
    %42 = vector.shape_cast %39 : vector<8x16x128xbf16> to vector<1x8x16x128xbf16>
    tpu.vector_store %arg7[%c0_19, %c0_20, %c0_21, %c0_22], %42 {strides = array<i32>} : memref<1x8x16x128xbf16, #tpu.memory_space<vmem>>, vector<1x8x16x128xbf16>,
    return
  }
  func.func @transform_0(%arg0: i32, %arg1: i32) -> (i32, i32, i32, i32) {
    %c0_i32 = arith.constant 0 : i32
    %c0_i32_0 = arith.constant 0 : i32
    %c0_i32_1 = arith.constant 0 : i32
    return %arg0, %arg1, %c0_i32, %c0_i32_0 : i32, i32, i32, i32
  }
  func.func @transform_1(%arg0: i32, %arg1: i32) -> (i32, i32, i32, i32) {
    %c8_i32 = arith.constant 8 : i32
    %0 = arith.muli %arg1, %c8_i32 : i32
    %c1_i32 = arith.constant 1 : i32
    %1 = arith.subi %0, %c1_i32 : i32
    %c0_i32 = arith.constant 0 : i32
    %2 = arith.maxsi %1, %c0_i32 : i32
    %c0_i32_0 = arith.constant 0 : i32
    %c0_i32_1 = arith.constant 0 : i32
    %c0_i32_2 = arith.constant 0 : i32
    return %arg0, %2, %c0_i32_0, %c0_i32_1 : i32, i32, i32, i32
  }
  func.func @transform_2(%arg0: i32, %arg1: i32) -> (i32, i32, i32, i32) {
    %c8_i32 = arith.constant 8 : i32
    %0 = arith.muli %arg1, %c8_i32 : i32
    %c8_i32_0 = arith.constant 8 : i32
    %1 = arith.addi %0, %c8_i32_0 : i32
    %c15_i32 = arith.constant 15 : i32
    %2 = arith.minsi %1, %c15_i32 : i32
    %c0_i32 = arith.constant 0 : i32
    %c0_i32_1 = arith.constant 0 : i32
    %c0_i32_2 = arith.constant 0 : i32
    return %arg0, %2, %c0_i32, %c0_i32_1 : i32, i32, i32, i32
  }
  func.func @transform_3(%arg0: i32, %arg1: i32) -> (i32, i32) {
    %c0_i32 = arith.constant 0 : i32
    %c0_i32_0 = arith.constant 0 : i32
    %c0_i32_1 = arith.constant 0 : i32
    return %c0_i32, %c0_i32_0 : i32, i32
  }
  func.func @transform_4(%arg0: i32, %arg1: i32) -> (i32, i32) {
    %c0_i32 = arith.constant 0 : i32
    %c0_i32_0 = arith.constant 0 : i32
    %c0_i32_1 = arith.constant 0 : i32
    return %c0_i32, %c0_i32_0 : i32, i32
  }
  func.func @transform_5(%arg0: i32, %arg1: i32) -> (i32, i32, i32, i32) {
    %c0_i32 = arith.constant 0 : i32
    %c0_i32_0 = arith.constant 0 : i32
    %c0_i32_1 = arith.constant 0 : i32
    return %arg0, %arg1, %c0_i32, %c0_i32_0 : i32, i32, i32, i32
  }
}

</mosaic_0001>

<llo_original>
// kernel: tpu_custom_call.1
$region0: #{tpu_custom_call.1}
  #allocation0 [shape = 'u32[]', space=smem, size = 0x4, offset = 0x4, fixed_abs, tag = 'smem constant byte address 0x4 - core index']
  #allocation1 [shape = 'u32[144,128]{1,0:T(1,128)}', space=vmem, size = 0x12000, scoped, tag = 'internal scratch']
  %s0 = inlined_call_operand.hbm [shape: bf16[2,16,16,128], index: 0, kind: input, shape index: {}]
  %s1 = inlined_call_operand.hbm [shape: bf16[2,16,16,128], index: 1, kind: input, shape index: {}]
  %s2 = inlined_call_operand.hbm [shape: bf16[2,16,16,128], index: 2, kind: input, shape index: {}]
  %s3 = inlined_call_operand.hbm [shape: bf16[384,384], index: 3, kind: input, shape index: {}]
  %s4 = inlined_call_operand.vmem [shape: f32[1,128], index: 4, kind: input, shape index: {}]
  %s5 = inlined_call_operand.hbm [shape: bf16[2,16,16,128], index: 5, kind: output, shape index: {}]
  %s6 = sld [smem:[#allocation0]]
  $region69: #{tpu_custom_call.1} parent=0
    _
  %s8 = ssub.s32 1, %s6
  %s9 = scalar_select 0, %s8, %s6
  $region1: #{tpu_custom_call.1} parent=0
    #allocation2 [shape = 'u8[65536]{0}', space=vmem, size = 0x10000, scoped, tag = 'input window, operand 0']
    #allocation3 [shape = 's32[2]{0}', space=sflag, size = 0x8, scoped, tag = 'scoped memory for tpu_custom_call.1']
    #allocation4 [shape = 's32[2]{0}', space=sflag, size = 0x8, scoped, tag = 'scoped memory for tpu_custom_call.1']
    #allocation5 [shape = 'u8[8192]{0}', space=vmem, size = 0x2000, scoped, tag = 'input window, operand 1']
    #allocation6 [shape = 's32[2]{0}', space=sflag, size = 0x8, scoped, tag = 'scoped memory for tpu_custom_call.1']
    #allocation7 [shape = 'u8[8192]{0}', space=vmem, size = 0x2000, scoped, tag = 'input window, operand 2']
    #allocation8 [shape = 'u8[294912]{0}', space=vmem, size = 0x48000, scoped, tag = 'input window, operand 3, single buffered']
    #allocation9 [shape = 's32[1]{0}', space=sflag, size = 0x4, scoped, tag = 'scoped memory for tpu_custom_call.1']
    #allocation10 [shape = 'u8[65536]{0}', space=vmem, size = 0x10000, scoped, tag = 'output window, operand 0']
    %10 = vsyncpa [#allocation3], 0
    %s11 = scalar_lea.sflag [#allocation3], 1
    %12 = vsyncpa %s11, 0
    %13 = vsyncpa [#allocation6], 0
    %s14 = scalar_lea.sflag [#allocation6], 1
    %15 = vsyncpa %s14, 0
    %16 = vsyncpa [#allocation9], 0
    %17 = vsyncpa [#allocation4], 0
    %s18 = scalar_lea.sflag [#allocation4], 1
    %19 = vsyncpa %s18, 0
    loop: start=0, step=1, limit=6
    $region2: #{tpu_custom_call.1} parent=1 // loop_pre_header
      _
    $region3: #{tpu_custom_call.1} parent=1 // loop_header
      %s21 = sphi 0, %s25
      %p22 = scmp.ge.s32.totalorder %s21, 6
      %s28 = sphi 0, %s40
      %s29 = sphi 0, %s36
      %s30 = sphi 0, %s28
      %s31 = sphi 0, %s29
      %s32 = sphi 0, %s30
      %s33 = sphi 0, %s31
      %s45 = sphi 0, %s47
      %s48 = sphi 0, %s45
      %s49 = sphi 0, %s48
      %s65 = sphi 0, %s49
      %s81 = sphi 0, %s83
      %s84 = sphi 0, %s81
      %s85 = sphi 0, %s84
      %s101 = sphi 0, %s85
      %s117 = sphi 0, %s119
      %s120 = sphi 0, %s117
      %s121 = sphi 0, %s120
      %s137 = sphi 0, %s121
      %s141 = sphi 0, %s141
      %s143 = sphi 0, %s141
      %s144 = sphi 0, %s143
      %s158 = sphi 0, %s144
      %s162 = sphi 0, %s162
      %s164 = sphi 0, %s162
      %s165 = sphi 0, %s164
      %s179 = sphi 0, %s165
      %s187 = sphi 0, %s189
      %s190 = sphi 0, %s187
      %s191 = sphi 0, %s190
      %s207 = sphi 0, %s191
    $region4: #{tpu_custom_call.1} parent=1 // loop_header_branch
      %24 = sbr.rel (%p22) target = $region8
    $region5: #{tpu_custom_call.1} parent=1 // loop_body
      %s26 = ssub.s32 %s21, 1
      %s27 = ssub.s32 %s21, 2
      %s34 = sadd.s32 1, %s29
      %p35 = scmp.ge.s32.totalorder %s34, 2
      %s36 = scalar_select %p35, 0, %s34
      %s37 = sadd.s32 1, %s28
      %s38 = scalar_select %p35, %s37, %s28
      %p39 = scmp.ge.s32.totalorder %s38, 2
      %s40 = scalar_select %p39, 0, %s38
      %s41 = ssub.s32 %s28, %s40
      %s42 = ssub.s32 %s29, %s36
      %s43 = sor.u32 %s41, %s42
      %p44 = scmp.eq.s32.totalorder %s43, 0
      %s46 = sadd.s32 %s45, 1
      %s47 = scalar_select %p44, %s45, %s46
      %p50 = pneg %p44
      %p51 = scmp.eq.s32.totalorder %s21, 3
      %p52 = por %p50, %p51
      %p53 = scmp.ne.s32.totalorder %s45, %s48
      %p54 = scmp.eq.s32.totalorder %s21, 0
      %p55 = por %p53, %p54
      %p56 = scmp.ne.s32.totalorder %s45, %s48
      %p57 = scmp.eq.s32.totalorder %s26, 3
      %p58 = por %p56, %p57
      %p59 = scmp.ne.s32.totalorder %s48, %s49
      %p60 = scmp.eq.s32.totalorder %s26, 0
      %p61 = por %p59, %p60
      %p62 = scmp.ne.s32.totalorder %s48, %s49
      %p63 = scmp.eq.s32.totalorder %s27, 3
      %p64 = por %p62, %p63
      %p66 = scmp.ne.s32.totalorder %s49, %s65
      %p67 = scmp.eq.s32.totalorder %s27, 0
      %p68 = por %p66, %p67
      %s69 = smul.u32 %s29, 8
      %s70 = ssub.s32 %s69, 1
      %p71 = scmp.gt.s32.totalorder %s70, 0
      %s72 = scalar_select %p71, %s70, 0
      %s73 = smul.u32 %s36, 8
      %s74 = ssub.s32 %s73, 1
      %p75 = scmp.gt.s32.totalorder %s74, 0
      %s76 = scalar_select %p75, %s74, 0
      %s77 = ssub.s32 %s28, %s40
      %s78 = ssub.s32 %s72, %s76
      %s79 = sor.u32 %s77, %s78
      %p80 = scmp.eq.s32.totalorder %s79, 0
      %s82 = sadd.s32 %s81, 1
      %s83 = scalar_select %p80, %s81, %s82
      %p86 = pneg %p80
      %p87 = scmp.eq.s32.totalorder %s21, 3
      %p88 = por %p86, %p87
      %p89 = scmp.ne.s32.totalorder %s81, %s84
      %p90 = scmp.eq.s32.totalorder %s21, 0
      %p91 = por %p89, %p90
      %p92 = scmp.ne.s32.totalorder %s81, %s84
      %p93 = scmp.eq.s32.totalorder %s26, 3
      %p94 = por %p92, %p93
      %p95 = scmp.ne.s32.totalorder %s84, %s85
      %p96 = scmp.eq.s32.totalorder %s26, 0
      %p97 = por %p95, %p96
      %p98 = scmp.ne.s32.totalorder %s84, %s85
      %p99 = scmp.eq.s32.totalorder %s27, 3
      %p100 = por %p98, %p99
      %p102 = scmp.ne.s32.totalorder %s85, %s101
      %p103 = scmp.eq.s32.totalorder %s27, 0
      %p104 = por %p102, %p103
      %s105 = smul.u32 %s29, 8
      %s106 = sadd.s32 %s105, 8
      %p107 = scmp.lt.s32.totalorder %s106, 15
      %s108 = scalar_select %p107, %s106, 15
      %s109 = smul.u32 %s36, 8
      %s110 = sadd.s32 %s109, 8
      %p111 = scmp.lt.s32.totalorder %s110, 15
      %s112 = scalar_select %p111, %s110, 15
      %s113 = ssub.s32 %s28, %s40
      %s114 = ssub.s32 %s108, %s112
      %s115 = sor.u32 %s113, %s114
      %p116 = scmp.eq.s32.totalorder %s115, 0
      %s118 = sadd.s32 %s117, 1
      %s119 = scalar_select %p116, %s117, %s118
      %p122 = pneg %p116
      %p123 = scmp.eq.s32.totalorder %s21, 3
      %p124 = por %p122, %p123
      %p125 = scmp.ne.s32.totalorder %s117, %s120
      %p126 = scmp.eq.s32.totalorder %s21, 0
      %p127 = por %p125, %p126
      %p128 = scmp.ne.s32.totalorder %s117, %s120
      %p129 = scmp.eq.s32.totalorder %s26, 3
      %p130 = por %p128, %p129
      %p131 = scmp.ne.s32.totalorder %s120, %s121
      %p132 = scmp.eq.s32.totalorder %s26, 0
      %p133 = por %p131, %p132
      %p134 = scmp.ne.s32.totalorder %s120, %s121
      %p135 = scmp.eq.s32.totalorder %s27, 3
      %p136 = por %p134, %p135
      %p138 = scmp.ne.s32.totalorder %s121, %s137
      %p139 = scmp.eq.s32.totalorder %s27, 0
      %p140 = por %p138, %p139
      %s142 = sadd.s32 %s141, 1
      %p145 = scmp.eq.s32.totalorder %s21, 3
      %p146 = scmp.ne.s32.totalorder %s141, %s143
      %p147 = scmp.eq.s32.totalorder %s21, 0
      %p148 = por %p146, %p147
      %p149 = scmp.ne.s32.totalorder %s141, %s143
      %p150 = scmp.eq.s32.totalorder %s26, 3
      %p151 = por %p149, %p150
      %p152 = scmp.ne.s32.totalorder %s143, %s144
      %p153 = scmp.eq.s32.totalorder %s26, 0
      %p154 = por %p152, %p153
      %p155 = scmp.ne.s32.totalorder %s143, %s144
      %p156 = scmp.eq.s32.totalorder %s27, 3
      %p157 = por %p155, %p156
      %p159 = scmp.ne.s32.totalorder %s144, %s158
      %p160 = scmp.eq.s32.totalorder %s27, 0
      %p161 = por %p159, %p160
      %s163 = sadd.s32 %s162, 1
      %p166 = scmp.eq.s32.totalorder %s21, 3
      %p167 = scmp.ne.s32.totalorder %s162, %s164
      %p168 = scmp.eq.s32.totalorder %s21, 0
      %p169 = por %p167, %p168
      %p170 = scmp.ne.s32.totalorder %s162, %s164
      %p171 = scmp.eq.s32.totalorder %s26, 3
      %p172 = por %p170, %p171
      %p173 = scmp.ne.s32.totalorder %s164, %s165
      %p174 = scmp.eq.s32.totalorder %s26, 0
      %p175 = por %p173, %p174
      %p176 = scmp.ne.s32.totalorder %s164, %s165
      %p177 = scmp.eq.s32.totalorder %s27, 3
      %p178 = por %p176, %p177
      %p180 = scmp.ne.s32.totalorder %s165, %s179
      %p181 = scmp.eq.s32.totalorder %s27, 0
      %p182 = por %p180, %p181
      %s183 = ssub.s32 %s28, %s40
      %s184 = ssub.s32 %s29, %s36
      %s185 = sor.u32 %s183, %s184
      %p186 = scmp.eq.s32.totalorder %s185, 0
      %s188 = sadd.s32 %s187, 1
      %s189 = scalar_select %p186, %s187, %s188
      %p192 = pneg %p186
      %p193 = scmp.eq.s32.totalorder %s21, 3
      %p194 = por %p192, %p193
      %p195 = scmp.ne.s32.totalorder %s187, %s190
      %p196 = scmp.eq.s32.totalorder %s21, 0
      %p197 = por %p195, %p196
      %p198 = scmp.ne.s32.totalorder %s187, %s190
      %p199 = scmp.eq.s32.totalorder %s26, 3
      %p200 = por %p198, %p199
      %p201 = scmp.ne.s32.totalorder %s190, %s191
      %p202 = scmp.eq.s32.totalorder %s26, 0
      %p203 = por %p201, %p202
      %p204 = scmp.ne.s32.totalorder %s190, %s191
      %p205 = scmp.eq.s32.totalorder %s27, 3
      %p206 = por %p204, %p205
      %p208 = scmp.ne.s32.totalorder %s191, %s207
      %p209 = scmp.eq.s32.totalorder %s27, 0
      %p210 = por %p208, %p209
      %p211 = scmp.le.s32.totalorder 1, %s21
      %p212 = scmp.lt.s32.totalorder %s21, 5
      %p213 = pnand %p211, %p212
      %p214 = pneg %p213
      // Predicated region
      $region9: #{tpu_custom_call.1} parent=5 // pred_check
        _
      $region10: #{tpu_custom_call.1} parent=5 // pred_check_branch
        %216 = sbr.rel (%p213) target = $region12
      $region11: #{tpu_custom_call.1} parent=5 // pred_region
        %s217 = ssub.s32 %s21, 1
        // Predicated region
        $region13: #{tpu_custom_call.1} parent=11 // pred_check
          %p218 = pneg %p154
        $region14: #{tpu_custom_call.1} parent=11 // pred_check_branch
          %220 = sbr.rel (%p218) target = $region16
        $region15: #{tpu_custom_call.1} parent=11 // pred_region
          %s222 = ssub.s32 9216, 9216
          %223 = vsyncadd [#allocation9], %s222
          %s224 = sshll.u32 [#allocation8], 4
          %s225 = int_to_ptr.vmem [resolvable:$true] %s224
          %230 = dma.hbm_to_vmem [thread:$0]  %s3, 9216, %s225, [#allocation9], 192, 192, 12
        $region16: #{tpu_custom_call.1} parent=11 // pred_fallthru
          _
        // Predicated region
        $region17: #{tpu_custom_call.1} parent=11 // pred_check
          %p231 = pneg %p175
        $region18: #{tpu_custom_call.1} parent=11 // pred_check_branch
          %233 = sbr.rel (%p231) target = $region20
        $region19: #{tpu_custom_call.1} parent=11 // pred_region
          _
        $region20: #{tpu_custom_call.1} parent=11 // pred_fallthru
          _
      $region12: #{tpu_custom_call.1} parent=5 // pred_fallthru
        _
      %p234 = scmp.lt.s32.totalorder %s21, 4
      // Predicated region
      $region21: #{tpu_custom_call.1} parent=5 // pred_check
        %p235 = pneg %p234
      $region22: #{tpu_custom_call.1} parent=5 // pred_check_branch
        %237 = sbr.rel (%p235) target = $region24
      $region23: #{tpu_custom_call.1} parent=5 // pred_region
        // Predicated region
        $region25: #{tpu_custom_call.1} parent=23 // pred_check
          %p238 = pneg %p55
        $region26: #{tpu_custom_call.1} parent=23 // pred_check_branch
          %240 = sbr.rel (%p238) target = $region28
        $region27: #{tpu_custom_call.1} parent=23 // pred_region
          %s241 = sand.u32 %s45, 1
          %s242 = scalar_lea.sflag [#allocation3], %s241
          %s243 = sand.u32 %s45, 1
          %s244 = smul.addr %s243, 64
          %s245 = scalar_lea.vmem [#allocation2], %s244
          %s246 = smul.u32 8, %s29
          %s248 = ssub.s32 1024, 1024
          %249 = vsyncadd %s242, %s248
          %s250 = smul.addr %s246, 2
          %s251 = smul.addr %s28, 32
          %s252 = sadd.s32 %s250, %s251
          %s253 = smul.addr %s252, 64
          %s254 = scalar_lea.hbm %s0, %s253
          %s255 = sshll.u32 %s245, 4
          %s256 = int_to_ptr.vmem [resolvable:$true] %s255
          %261 = dma.hbm_to_vmem [thread:$0]  %s254, 1024, %s256, %s242, 64, 64, 4
        $region28: #{tpu_custom_call.1} parent=23 // pred_fallthru
          _
        // Predicated region
        $region29: #{tpu_custom_call.1} parent=23 // pred_check
          %p262 = pneg %p91
        $region30: #{tpu_custom_call.1} parent=23 // pred_check_branch
          %264 = sbr.rel (%p262) target = $region32
        $region31: #{tpu_custom_call.1} parent=23 // pred_region
          %s265 = sand.u32 %s21, 1
          %s266 = scalar_lea.sflag [#allocation6], %s265
          %s267 = sand.u32 %s81, 1
          %s268 = smul.addr %s267, 8
          %s269 = scalar_lea.vmem [#allocation5], %s268
          %s270 = smul.u32 %s29, 8
          %s271 = ssub.s32 %s270, 1
          %p272 = scmp.gt.s32.totalorder %s271, 0
          %s273 = scalar_select %p272, %s271, 0
          %s275 = ssub.s32 128, 128
          %276 = vsyncadd %s266, %s275
          %s277 = smul.addr %s273, 2
          %s278 = smul.addr %s28, 32
          %s279 = sadd.s32 %s277, %s278
          %s280 = smul.addr %s279, 64
          %s281 = scalar_lea.hbm %s1, %s280
          %s282 = sshll.u32 %s269, 4
          %s283 = int_to_ptr.vmem [resolvable:$true] %s282
          %288 = dma.hbm_to_vmem [thread:$0]  %s281, 128, %s283, %s266, 64, 64, 4
        $region32: #{tpu_custom_call.1} parent=23 // pred_fallthru
          _
        // Predicated region
        $region33: #{tpu_custom_call.1} parent=23 // pred_check
          %p289 = pneg %p127
        $region34: #{tpu_custom_call.1} parent=23 // pred_check_branch
          %291 = sbr.rel (%p289) target = $region36
        $region35: #{tpu_custom_call.1} parent=23 // pred_region
          %s292 = sand.u32 %s21, 1
          %s293 = scalar_lea.sflag [#allocation6], %s292
          %s294 = sand.u32 %s117, 1
          %s295 = smul.addr %s294, 8
          %s296 = scalar_lea.vmem [#allocation7], %s295
          %s297 = smul.u32 %s29, 8
          %s298 = sadd.s32 %s297, 8
          %p299 = scmp.lt.s32.totalorder %s298, 15
          %s300 = scalar_select %p299, %s298, 15
          %s302 = ssub.s32 128, 128
          %303 = vsyncadd %s293, %s302
          %s304 = smul.addr %s300, 2
          %s305 = smul.addr %s28, 32
          %s306 = sadd.s32 %s304, %s305
          %s307 = smul.addr %s306, 64
          %s308 = scalar_lea.hbm %s2, %s307
          %s309 = sshll.u32 %s296, 4
          %s310 = int_to_ptr.vmem [resolvable:$true] %s309
          %315 = dma.hbm_to_vmem [thread:$0]  %s308, 128, %s310, %s293, 64, 64, 4
        $region36: #{tpu_custom_call.1} parent=23 // pred_fallthru
          _
      $region24: #{tpu_custom_call.1} parent=5 // pred_fallthru
        _
      %p316 = scmp.le.s32.totalorder 1, %s21
      %p317 = scmp.lt.s32.totalorder %s21, 5
      %p318 = pnand %p316, %p317
      %p319 = pneg %p318
      // Predicated region
      $region37: #{tpu_custom_call.1} parent=5 // pred_check
        _
      $region38: #{tpu_custom_call.1} parent=5 // pred_check_branch
        %321 = sbr.rel (%p318) target = $region40
      $region39: #{tpu_custom_call.1} parent=5 // pred_region
        %s322 = ssub.s32 %s21, 1
        %s323 = sand.u32 %s48, 1
        %s324 = scalar_lea.sflag [#allocation3], %s323
        %s325 = sand.u32 %s48, 1
        %s326 = smul.addr %s325, 64
        %s327 = scalar_lea.vmem [#allocation2], %s326
        // Predicated region
        $region41: #{tpu_custom_call.1} parent=39 // pred_check
          %p328 = pneg %p61
        $region42: #{tpu_custom_call.1} parent=39 // pred_check_branch
          %330 = sbr.rel (%p328) target = $region44
        $region43: #{tpu_custom_call.1} parent=39 // pred_region
          %331 = dma.done %s324, 1024
        $region44: #{tpu_custom_call.1} parent=39 // pred_fallthru
          _
        %s332 = sand.u32 %s26, 1
        %s333 = scalar_lea.sflag [#allocation6], %s332
        %s334 = sand.u32 %s84, 1
        %s335 = smul.addr %s334, 8
        %s336 = scalar_lea.vmem [#allocation5], %s335
        // Predicated region
        $region45: #{tpu_custom_call.1} parent=39 // pred_check
          %p337 = pneg %p97
        $region46: #{tpu_custom_call.1} parent=39 // pred_check_branch
          %339 = sbr.rel (%p337) target = $region48
        $region47: #{tpu_custom_call.1} parent=39 // pred_region
          %340 = dma.done %s333, 128
        $region48: #{tpu_custom_call.1} parent=39 // pred_fallthru
          _
        %s341 = sand.u32 %s26, 1
        %s342 = scalar_lea.sflag [#allocation6], %s341
        %s343 = sand.u32 %s120, 1
        %s344 = smul.addr %s343, 8
        %s345 = scalar_lea.vmem [#allocation7], %s344
        // Predicated region
        $region49: #{tpu_custom_call.1} parent=39 // pred_check
          %p346 = pneg %p133
        $region50: #{tpu_custom_call.1} parent=39 // pred_check_branch
          %348 = sbr.rel (%p346) target = $region52
        $region51: #{tpu_custom_call.1} parent=39 // pred_region
          %349 = dma.done %s342, 128
        $region52: #{tpu_custom_call.1} parent=39 // pred_fallthru
          _
        // Predicated region
        $region53: #{tpu_custom_call.1} parent=39 // pred_check
          %p350 = pneg %p154
        $region54: #{tpu_custom_call.1} parent=39 // pred_check_branch
          %352 = sbr.rel (%p350) target = $region56
        $region55: #{tpu_custom_call.1} parent=39 // pred_region
          %353 = dma.done [#allocation9], 9216
        $region56: #{tpu_custom_call.1} parent=39 // pred_fallthru
          _
        %s354 = sand.u32 %s48, 1
        %s355 = scalar_lea.sflag [#allocation3], %s354
        %s356 = sand.u32 %s48, 1
        %s357 = smul.addr %s356, 64
        %s358 = scalar_lea.vmem [#allocation2], %s357
        %p359 = pneg %p61
        %p360 = pneg %p58
        %s361 = sand.u32 %s26, 1
        %s362 = scalar_lea.sflag [#allocation6], %s361
        %s363 = sand.u32 %s84, 1
        %s364 = smul.addr %s363, 8
        %s365 = scalar_lea.vmem [#allocation5], %s364
        %p366 = pneg %p97
        %p367 = pneg %p94
        %s368 = sand.u32 %s26, 1
        %s369 = scalar_lea.sflag [#allocation6], %s368
        %s370 = sand.u32 %s120, 1
        %s371 = smul.addr %s370, 8
        %s372 = scalar_lea.vmem [#allocation7], %s371
        %p373 = pneg %p133
        %p374 = pneg %p130
        %p375 = pneg %p154
        %p376 = pneg %p151
        %p377 = pneg %p175
        %p378 = pneg %p172
        %p379 = pneg %p203
        %p380 = pneg %p200
        %s381 = sand.u32 %s190, 1
        %s382 = scalar_lea.sflag [#allocation4], %s381
        %s383 = sand.u32 %s190, 1
        %s384 = smul.addr %s383, 64
        %s385 = scalar_lea.vmem [#allocation10], %s384
        %s386 = smul.u32 8, %s31
        %s387 = smul.u32 %s31, 8
        %s388 = ssub.s32 %s387, 1
        %p389 = scmp.gt.s32.totalorder %s388, 0
        %s390 = scalar_select %p389, %s388, 0
        %s391 = smul.u32 %s31, 8
        %s392 = sadd.s32 %s391, 8
        %p393 = scmp.lt.s32.totalorder %s392, 15
        %s394 = scalar_select %p393, %s392, 15
        %s395 = smul.u32 8, %s31
        %v397 = vld [vmem:[%s327] sm:$0xf]
        %v398 = vld [vmem:[%s327 + $0x4] sm:$0xf]
        %v399 = vld [vmem:[%s327 + $0x8] sm:$0xf]
        %v400 = vld [vmem:[%s327 + $0xc] sm:$0xf]
        %v401 = vld [vmem:[%s327 + $0x10] sm:$0xf]
        %v402 = vld [vmem:[%s327 + $0x14] sm:$0xf]
        %v403 = vld [vmem:[%s327 + $0x18] sm:$0xf]
        %v404 = vld [vmem:[%s327 + $0x1c] sm:$0xf]
        %v405 = vld [vmem:[%s327 + $0x20] sm:$0xf]
        %v406 = vld [vmem:[%s327 + $0x24] sm:$0xf]
        %v407 = vld [vmem:[%s327 + $0x28] sm:$0xf]
        %v408 = vld [vmem:[%s327 + $0x2c] sm:$0xf]
        %v409 = vld [vmem:[%s327 + $0x30] sm:$0xf]
        %v410 = vld [vmem:[%s327 + $0x34] sm:$0xf]
        %v411 = vld [vmem:[%s327 + $0x38] sm:$0xf]
        %v412 = vld [vmem:[%s327 + $0x3c] sm:$0xf]
        %v413 = vld [vmem:[%s336] sm:$0xf]
        %v414 = vld [vmem:[%s336 + $0x4] sm:$0xf]
        %v415 = vld [vmem:[%s345] sm:$0xf]
        %v416 = vld [vmem:[%s345 + $0x4] sm:$0xf]
        %p417 = scmp.gt.s32.totalorder %s31, 0
        %s418 = scalar_select %p417, 1, 0
        %v419 = vstv %s418
        %vm420 = vcmp.eq.s32.totalorder %v419, 1
        %v421 = vsel %vm420, %v413, 0
        %v422 = vsel %vm420, %v414, 0
        %p423 = scmp.lt.s32.totalorder %s31, 1
        %s424 = scalar_select %p423, 1, 0
        %v425 = vstv %s424
        %vm426 = vcmp.eq.s32.totalorder %v425, 1
        %v427 = vsel %vm426, %v415, 0
        %v428 = vsel %vm426, %v416, 0
        %v445 = vunpack.c.l.b16 %v421
        %v446 = vunpack.c.l.b16 %v422
        %v447 = vunpack.c.l.b16 %v397
        %v448 = vunpack.c.l.b16 %v398
        %v449 = vunpack.c.l.b16 %v399
        %v450 = vunpack.c.l.b16 %v400
        %v451 = vunpack.c.l.b16 %v401
        %v452 = vunpack.c.l.b16 %v402
        %v453 = vunpack.c.l.b16 %v403
        %v454 = vunpack.c.l.b16 %v404
        %v455 = vunpack.c.l.b16 %v405
        %v456 = vunpack.c.l.b16 %v406
        %v457 = vunpack.c.l.b16 %v407
        %v458 = vunpack.c.l.b16 %v408
        %v459 = vunpack.c.l.b16 %v409
        %v460 = vunpack.c.l.b16 %v410
        %v461 = vpack.c.b16 %v446, %v445
        %v462 = vpack.c.b16 %v448, %v447
        %v463 = vpack.c.b16 %v450, %v449
        %v464 = vpack.c.b16 %v452, %v451
        %v465 = vpack.c.b16 %v454, %v453
        %v466 = vpack.c.b16 %v456, %v455
        %v467 = vpack.c.b16 %v458, %v457
        %v468 = vpack.c.b16 %v460, %v459
        %v479 = vunpack.c.l.b16 %v411
        %v480 = vunpack.c.l.b16 %v412
        %v481 = vpack.c.b16 %v480, %v479
        %v485 = vunpack.c.l.b16 %v427
        %v486 = vunpack.c.l.b16 %v428
        %v487 = vpack.c.b16 %v486, %v485
        %v489 = vld [vmem:[#allocation8] sm:$0xff]
        %v490 = vld [vmem:[#allocation8 + $0x8] sm:$0xf]
        %v491 = vld [vmem:[#allocation8 + $0xc] sm:$0xff]
        %v492 = vld [vmem:[#allocation8 + $0x14] sm:$0xf]
        %v493 = vld [vmem:[#allocation8 + $0x18] sm:$0xff]
        %v494 = vld [vmem:[#allocation8 + $0x20] sm:$0xf]
        %v495 = vld [vmem:[#allocation8 + $0x24] sm:$0xff]
        %v496 = vld [vmem:[#allocation8 + $0x2c] sm:$0xf]
        %v497 = vld [vmem:[#allocation8 + $0x30] sm:$0xff]
        %v498 = vld [vmem:[#allocation8 + $0x38] sm:$0xf]
        %v499 = vld [vmem:[#allocation8 + $0x3c] sm:$0xff]
        %v500 = vld [vmem:[#allocation8 + $0x44] sm:$0xf]
        %v501 = vld [vmem:[#allocation8 + $0x48] sm:$0xff]
        %v502 = vld [vmem:[#allocation8 + $0x50] sm:$0xf]
        %v503 = vld [vmem:[#allocation8 + $0x54] sm:$0xff]
        %v504 = vld [vmem:[#allocation8 + $0x5c] sm:$0xf]
        %v505 = vld [vmem:[#allocation8 + $0x60] sm:$0xff]
        %v506 = vld [vmem:[#allocation8 + $0x68] sm:$0xf]
        %v507 = vld [vmem:[#allocation8 + $0x6c] sm:$0xff]
        %v508 = vld [vmem:[#allocation8 + $0x74] sm:$0xf]
        %v509 = vld [vmem:[#allocation8 + $0x78] sm:$0xff]
        %v510 = vld [vmem:[#allocation8 + $0x80] sm:$0xf]
        %v511 = vld [vmem:[#allocation8 + $0x84] sm:$0xff]
        %v512 = vld [vmem:[#allocation8 + $0x8c] sm:$0xf]
        %v513 = vld [vmem:[#allocation8 + $0x90] sm:$0xff]
        %v514 = vld [vmem:[#allocation8 + $0x98] sm:$0xf]
        %v515 = vld [vmem:[#allocation8 + $0x9c] sm:$0xff]
        %v516 = vld [vmem:[#allocation8 + $0xa4] sm:$0xf]
        %v517 = vld [vmem:[#allocation8 + $0xa8] sm:$0xff]
        %v518 = vld [vmem:[#allocation8 + $0xb0] sm:$0xf]
        %v519 = vld [vmem:[#allocation8 + $0xb4] sm:$0xff]
        %v520 = vld [vmem:[#allocation8 + $0xbc] sm:$0xf]
        %v521 = vld [vmem:[#allocation8 + $0xc0] sm:$0xff]
        %v522 = vld [vmem:[#allocation8 + $0xc8] sm:$0xf]
        %v523 = vld [vmem:[#allocation8 + $0xcc] sm:$0xff]
        %v524 = vld [vmem:[#allocation8 + $0xd4] sm:$0xf]
        %v525 = vld [vmem:[#allocation8 + $0xd8] sm:$0xff]
        %v526 = vld [vmem:[#allocation8 + $0xe0] sm:$0xf]
        %v527 = vld [vmem:[#allocation8 + $0xe4] sm:$0xff]
        %v528 = vld [vmem:[#allocation8 + $0xec] sm:$0xf]
        %v529 = vld [vmem:[#allocation8 + $0xf0] sm:$0xff]
        %v530 = vld [vmem:[#allocation8 + $0xf8] sm:$0xf]
        %v531 = vld [vmem:[#allocation8 + $0xfc] sm:$0xff]
        %v532 = vld [vmem:[#allocation8 + $0x104] sm:$0xf]
        %v533 = vld [vmem:[#allocation8 + $0x108] sm:$0xff]
        %v534 = vld [vmem:[#allocation8 + $0x110] sm:$0xf]
        %v535 = vld [vmem:[#allocation8 + $0x114] sm:$0xff]
        %v536 = vld [vmem:[#allocation8 + $0x11c] sm:$0xf]
        %v537 = vld [vmem:[#allocation8 + $0x120] sm:$0xff]
        %v538 = vld [vmem:[#allocation8 + $0x128] sm:$0xf]
        %v539 = vld [vmem:[#allocation8 + $0x12c] sm:$0xff]
        %v540 = vld [vmem:[#allocation8 + $0x134] sm:$0xf]
        %v541 = vld [vmem:[#allocation8 + $0x138] sm:$0xff]
        %v542 = vld [vmem:[#allocation8 + $0x140] sm:$0xf]
        %v543 = vld [vmem:[#allocation8 + $0x144] sm:$0xff]
        %v544 = vld [vmem:[#allocation8 + $0x14c] sm:$0xf]
        %v545 = vld [vmem:[#allocation8 + $0x150] sm:$0xff]
        %v546 = vld [vmem:[#allocation8 + $0x158] sm:$0xf]
        %v547 = vld [vmem:[#allocation8 + $0x15c] sm:$0xff]
        %v548 = vld [vmem:[#allocation8 + $0x164] sm:$0xf]
        %v549 = vld [vmem:[#allocation8 + $0x168] sm:$0xff]
        %v550 = vld [vmem:[#allocation8 + $0x170] sm:$0xf]
        %v551 = vld [vmem:[#allocation8 + $0x174] sm:$0xff]
        %v552 = vld [vmem:[#allocation8 + $0x17c] sm:$0xf]
        %v553 = vld [vmem:[#allocation8 + $0x180] sm:$0xff]
        %v554 = vld [vmem:[#allocation8 + $0x188] sm:$0xf]
        %v555 = vld [vmem:[#allocation8 + $0x18c] sm:$0xff]
        %v556 = vld [vmem:[#allocation8 + $0x194] sm:$0xf]
        %v557 = vld [vmem:[#allocation8 + $0x198] sm:$0xff]
        %v558 = vld [vmem:[#allocation8 + $0x1a0] sm:$0xf]
        %v559 = vld [vmem:[#allocation8 + $0x1a4] sm:$0xff]
        %v560 = vld [vmem:[#allocation8 + $0x1ac] sm:$0xf]
        %v561 = vld [vmem:[#allocation8 + $0x1b0] sm:$0xff]
        %v562 = vld [vmem:[#allocation8 + $0x1b8] sm:$0xf]
        %v563 = vld [vmem:[#allocation8 + $0x1bc] sm:$0xff]
        %v564 = vld [vmem:[#allocation8 + $0x1c4] sm:$0xf]
        %v565 = vld [vmem:[#allocation8 + $0x1c8] sm:$0xff]
        %v566 = vld [vmem:[#allocation8 + $0x1d0] sm:$0xf]
        %v567 = vld [vmem:[#allocation8 + $0x1d4] sm:$0xff]
        %v568 = vld [vmem:[#allocation8 + $0x1dc] sm:$0xf]
        %v569 = vld [vmem:[#allocation8 + $0x1e0] sm:$0xff]
        %v570 = vld [vmem:[#allocation8 + $0x1e8] sm:$0xf]
        %v571 = vld [vmem:[#allocation8 + $0x1ec] sm:$0xff]
        %v572 = vld [vmem:[#allocation8 + $0x1f4] sm:$0xf]
        %v573 = vld [vmem:[#allocation8 + $0x1f8] sm:$0xff]
        %v574 = vld [vmem:[#allocation8 + $0x200] sm:$0xf]
        %v575 = vld [vmem:[#allocation8 + $0x204] sm:$0xff]
        %v576 = vld [vmem:[#allocation8 + $0x20c] sm:$0xf]
        %v577 = vld [vmem:[#allocation8 + $0x210] sm:$0xff]
        %v578 = vld [vmem:[#allocation8 + $0x218] sm:$0xf]
        %v579 = vld [vmem:[#allocation8 + $0x21c] sm:$0xff]
        %v580 = vld [vmem:[#allocation8 + $0x224] sm:$0xf]
        %v581 = vld [vmem:[#allocation8 + $0x228] sm:$0xff]
        %v582 = vld [vmem:[#allocation8 + $0x230] sm:$0xf]
        %v583 = vld [vmem:[#allocation8 + $0x234] sm:$0xff]
        %v584 = vld [vmem:[#allocation8 + $0x23c] sm:$0xf]
        %v681 = vunpack.c.l.b16 %v489
        %v682 = vunpack.c.h.b16 %v489
        %v683 = vunpack.c.l.b16 %v490
        %v684 = vunpack.c.l.b16 %v491
        %v685 = vunpack.c.h.b16 %v491
        %v686 = vunpack.c.l.b16 %v492
        %v687 = vunpack.c.l.b16 %v493
        %v688 = vunpack.c.h.b16 %v493
        %v689 = vunpack.c.l.b16 %v494
        %v690 = vunpack.c.l.b16 %v495
        %v691 = vunpack.c.h.b16 %v495
        %v692 = vunpack.c.l.b16 %v496
        %v693 = vunpack.c.l.b16 %v497
        %v694 = vunpack.c.h.b16 %v497
        %v695 = vunpack.c.l.b16 %v498
        %v696 = vunpack.c.l.b16 %v499
        %v697 = vunpack.c.h.b16 %v499
        %v698 = vunpack.c.l.b16 %v500
        %v699 = vunpack.c.l.b16 %v501
        %v700 = vunpack.c.h.b16 %v501
        %v701 = vunpack.c.l.b16 %v502
        %v702 = vunpack.c.l.b16 %v503
        %v703 = vunpack.c.h.b16 %v503
        %v704 = vunpack.c.l.b16 %v504
        %v705 = vunpack.c.l.b16 %v505
        %v706 = vunpack.c.h.b16 %v505
        %v707 = vunpack.c.l.b16 %v506
        %v708 = vunpack.c.l.b16 %v507
        %v709 = vunpack.c.h.b16 %v507
        %v710 = vunpack.c.l.b16 %v508
        %v711 = vunpack.c.l.b16 %v509
        %v712 = vunpack.c.h.b16 %v509
        %v713 = vunpack.c.l.b16 %v510
        %v714 = vunpack.c.l.b16 %v511
        %v715 = vunpack.c.h.b16 %v511
        %v716 = vunpack.c.l.b16 %v512
        %v717 = vunpack.c.l.b16 %v513
        %v718 = vunpack.c.h.b16 %v513
        %v719 = vunpack.c.l.b16 %v514
        %v720 = vunpack.c.l.b16 %v515
        %v721 = vunpack.c.h.b16 %v515
        %v722 = vunpack.c.l.b16 %v516
        %v723 = vunpack.c.l.b16 %v517
        %v724 = vunpack.c.h.b16 %v517
        %v725 = vunpack.c.l.b16 %v518
        %v726 = vunpack.c.l.b16 %v519
        %v727 = vunpack.c.h.b16 %v519
        %v728 = vunpack.c.l.b16 %v520
        %v729 = vunpack.c.l.b16 %v521
        %v730 = vunpack.c.h.b16 %v521
        %v731 = vunpack.c.l.b16 %v522
        %v732 = vunpack.c.l.b16 %v523
        %v733 = vunpack.c.h.b16 %v523
        %v734 = vunpack.c.l.b16 %v524
        %v735 = vunpack.c.l.b16 %v525
        %v736 = vunpack.c.h.b16 %v525
        %v737 = vunpack.c.l.b16 %v526
        %v738 = vunpack.c.l.b16 %v527
        %v739 = vunpack.c.h.b16 %v527
        %v740 = vunpack.c.l.b16 %v528
        %v741 = vunpack.c.l.b16 %v529
        %v742 = vunpack.c.h.b16 %v529
        %v743 = vunpack.c.l.b16 %v530
        %v744 = vunpack.c.l.b16 %v531
        %v745 = vunpack.c.h.b16 %v531
        %v746 = vunpack.c.l.b16 %v532
        %v747 = vunpack.c.l.b16 %v533
        %v748 = vunpack.c.h.b16 %v533
        %v749 = vunpack.c.l.b16 %v534
        %v750 = vunpack.c.l.b16 %v535
        %v751 = vunpack.c.h.b16 %v535
        %v752 = vunpack.c.l.b16 %v536
        %v753 = vunpack.c.l.b16 %v537
        %v754 = vunpack.c.h.b16 %v537
        %v755 = vunpack.c.l.b16 %v538
        %v756 = vunpack.c.l.b16 %v539
        %v757 = vunpack.c.h.b16 %v539
        %v758 = vunpack.c.l.b16 %v540
        %v759 = vunpack.c.l.b16 %v541
        %v760 = vunpack.c.h.b16 %v541
        %v761 = vunpack.c.l.b16 %v542
        %v762 = vunpack.c.l.b16 %v543
        %v763 = vunpack.c.h.b16 %v543
        %v764 = vunpack.c.l.b16 %v544
        %v765 = vunpack.c.l.b16 %v545
        %v766 = vunpack.c.h.b16 %v545
        %v767 = vunpack.c.l.b16 %v546
        %v768 = vunpack.c.l.b16 %v547
        %v769 = vunpack.c.h.b16 %v547
        %v770 = vunpack.c.l.b16 %v548
        %v771 = vunpack.c.l.b16 %v549
        %v772 = vunpack.c.h.b16 %v549
        %v773 = vunpack.c.l.b16 %v550
        %v774 = vunpack.c.l.b16 %v551
        %v775 = vunpack.c.h.b16 %v551
        %v776 = vunpack.c.l.b16 %v552
        %v777 = vunpack.c.l.b16 %v553
        %v778 = vunpack.c.h.b16 %v553
        %v779 = vunpack.c.l.b16 %v554
        %v780 = vunpack.c.l.b16 %v555
        %v781 = vunpack.c.h.b16 %v555
        %v782 = vunpack.c.l.b16 %v556
        %v783 = vunpack.c.l.b16 %v557
        %v784 = vunpack.c.h.b16 %v557
        %v785 = vunpack.c.l.b16 %v558
        %v786 = vunpack.c.l.b16 %v559
        %v787 = vunpack.c.h.b16 %v559
        %v788 = vunpack.c.l.b16 %v560
        %v789 = vunpack.c.l.b16 %v561
        %v790 = vunpack.c.h.b16 %v561
        %v791 = vunpack.c.l.b16 %v562
        %v792 = vunpack.c.l.b16 %v563
        %v793 = vunpack.c.h.b16 %v563
        %v794 = vunpack.c.l.b16 %v564
        %v795 = vunpack.c.l.b16 %v565
        %v796 = vunpack.c.h.b16 %v565
        %v797 = vunpack.c.l.b16 %v566
        %v798 = vunpack.c.l.b16 %v567
        %v799 = vunpack.c.h.b16 %v567
        %v800 = vunpack.c.l.b16 %v568
        %v801 = vunpack.c.l.b16 %v569
        %v802 = vunpack.c.h.b16 %v569
        %v803 = vunpack.c.l.b16 %v570
        %v804 = vunpack.c.l.b16 %v571
        %v805 = vunpack.c.h.b16 %v571
        %v806 = vunpack.c.l.b16 %v572
        %v807 = vunpack.c.l.b16 %v573
        %v808 = vunpack.c.h.b16 %v573
        %v809 = vunpack.c.l.b16 %v574
        %v810 = vunpack.c.l.b16 %v575
        %v811 = vunpack.c.h.b16 %v575
        %v812 = vunpack.c.l.b16 %v576
        %v813 = vunpack.c.l.b16 %v577
        %v814 = vunpack.c.h.b16 %v577
        %v815 = vunpack.c.l.b16 %v578
        %v816 = vunpack.c.l.b16 %v579
        %v817 = vunpack.c.h.b16 %v579
        %v818 = vunpack.c.l.b16 %v580
        %v819 = vunpack.c.l.b16 %v581
        %v820 = vunpack.c.h.b16 %v581
        %v821 = vunpack.c.l.b16 %v582
        %v822 = vunpack.c.l.b16 %v583
        %v823 = vunpack.c.h.b16 %v583
        %v824 = vunpack.c.l.b16 %v584
        %v825 = vpack.c.b16 %v684, %v681
        %v826 = vpack.c.b16 %v685, %v682
        %v827 = vpack.c.b16 %v686, %v683
        %v828 = vpack.c.b16 %v690, %v687
        %v829 = vpack.c.b16 %v691, %v688
        %v830 = vpack.c.b16 %v692, %v689
        %v831 = vpack.c.b16 %v696, %v693
        %v832 = vpack.c.b16 %v697, %v694
        %v833 = vpack.c.b16 %v698, %v695
        %v834 = vpack.c.b16 %v702, %v699
        %v835 = vpack.c.b16 %v703, %v700
        %v836 = vpack.c.b16 %v704, %v701
        %v837 = vpack.c.b16 %v708, %v705
        %v838 = vpack.c.b16 %v709, %v706
        %v839 = vpack.c.b16 %v710, %v707
        %v840 = vpack.c.b16 %v714, %v711
        %v841 = vpack.c.b16 %v715, %v712
        %v842 = vpack.c.b16 %v716, %v713
        %v843 = vpack.c.b16 %v720, %v717
        %v844 = vpack.c.b16 %v721, %v718
        %v845 = vpack.c.b16 %v722, %v719
        %v846 = vpack.c.b16 %v726, %v723
        %v847 = vpack.c.b16 %v727, %v724
        %v848 = vpack.c.b16 %v728, %v725
        %v849 = vpack.c.b16 %v732, %v729
        %v850 = vpack.c.b16 %v733, %v730
        %v851 = vpack.c.b16 %v734, %v731
        %v852 = vpack.c.b16 %v738, %v735
        %v853 = vpack.c.b16 %v739, %v736
        %v854 = vpack.c.b16 %v740, %v737
        %v855 = vpack.c.b16 %v744, %v741
        %v856 = vpack.c.b16 %v745, %v742
        %v857 = vpack.c.b16 %v746, %v743
        %v858 = vpack.c.b16 %v750, %v747
        %v859 = vpack.c.b16 %v751, %v748
        %v860 = vpack.c.b16 %v752, %v749
        %v861 = vpack.c.b16 %v756, %v753
        %v862 = vpack.c.b16 %v757, %v754
        %v863 = vpack.c.b16 %v758, %v755
        %v864 = vpack.c.b16 %v762, %v759
        %v865 = vpack.c.b16 %v763, %v760
        %v866 = vpack.c.b16 %v764, %v761
        %v867 = vpack.c.b16 %v768, %v765
        %v868 = vpack.c.b16 %v769, %v766
        %v869 = vpack.c.b16 %v770, %v767
        %v870 = vpack.c.b16 %v774, %v771
        %v871 = vpack.c.b16 %v775, %v772
        %v872 = vpack.c.b16 %v776, %v773
        %v873 = vpack.c.b16 %v780, %v777
        %v874 = vpack.c.b16 %v781, %v778
        %v875 = vpack.c.b16 %v782, %v779
        %v876 = vpack.c.b16 %v786, %v783
        %v877 = vpack.c.b16 %v787, %v784
        %v878 = vpack.c.b16 %v788, %v785
        %v879 = vpack.c.b16 %v792, %v789
        %v880 = vpack.c.b16 %v793, %v790
        %v881 = vpack.c.b16 %v794, %v791
        %v882 = vpack.c.b16 %v798, %v795
        %v883 = vpack.c.b16 %v799, %v796
        %v884 = vpack.c.b16 %v800, %v797
        %v885 = vpack.c.b16 %v804, %v801
        %v886 = vpack.c.b16 %v805, %v802
        %v887 = vpack.c.b16 %v806, %v803
        %v888 = vpack.c.b16 %v810, %v807
        %v889 = vpack.c.b16 %v811, %v808
        %v890 = vpack.c.b16 %v812, %v809
        %v891 = vpack.c.b16 %v816, %v813
        %v892 = vpack.c.b16 %v817, %v814
        %v893 = vpack.c.b16 %v818, %v815
        %v894 = vpack.c.b16 %v822, %v819
        %v895 = vpack.c.b16 %v823, %v820
        %v896 = vpack.c.b16 %v824, %v821
        %969 = vmatprep.subr.bf16.mxu0 %v826
        %970 = vmatpush1.bf16.msra.mxu0 %v825
        %971 = vmatprep.subr.bf16.mxu0 %v829
        %972 = vmatpush1.bf16.msra.mxu0 %v828
        %973 = vmatprep.subr.bf16.mxu0 %v832
        %974 = vmatpush1.bf16.msra.mxu0 %v831
        %975 = vmatprep.subr.bf16.mxu0 %v835
        %976 = vmatpush1.bf16.msra.mxu0 %v834
        %977 = vmatprep.subr.bf16.mxu0 %v838
        %978 = vmatpush1.bf16.msra.mxu0 %v837
        %979 = vmatprep.subr.bf16.mxu0 %v841
        %980 = vmatpush1.bf16.msra.mxu0 %v840
        %981 = vmatprep.subr.bf16.mxu0 %v844
        %982 = vmatpush1.bf16.msra.mxu0 %v843
        %983 = vmatprep.subr.bf16.mxu0 %v847
        %984 = vmatpush1.bf16.msra.mxu0 %v846
        %985 = vmatprep.subr.bf16.mxu0 %v850
        %986 = vmatpush1.bf16.msra.mxu0 %v849
        %987 = vmatprep.subr.bf16.mxu0 %v853
        %988 = vmatpush1.bf16.msra.mxu0 %v852
        %989 = vmatprep.subr.bf16.mxu0 %v856
        %990 = vmatpush1.bf16.msra.mxu0 %v855
        %991 = vmatprep.subr.bf16.mxu0 %v859
        %992 = vmatpush1.bf16.msra.mxu0 %v858
        %993 = vmatprep.subr.bf16.mxu0 %v862
        %994 = vmatpush1.bf16.msra.mxu0 %v861
        %995 = vmatprep.subr.bf16.mxu0 %v865
        %996 = vmatpush1.bf16.msra.mxu0 %v864
        %997 = vmatprep.subr.bf16.mxu0 %v868
        %998 = vmatpush1.bf16.msra.mxu0 %v867
        %999 = vmatprep.subr.bf16.mxu0 %v871
        %1000 = vmatpush1.bf16.msra.mxu0 %v870
        %1001 = vmatprep.mubr.bf16.mxu0 %v462
        %1002 = vmatmul.mubr.bf16.gmra.mrb[0].mxu0 %v461
        %v1003 = vpop.f32.mrb[0].mxu0
        %v1004 = vadd.f32 0.0, %v1003
        %v1005 = vpop.f32.mrb[0].mxu0
        %v1006 = vadd.f32 0.0, %v1005
        %v1007 = vpop.f32.mrb[0].mxu0
        %v1008 = vadd.f32 0.0, %v1007
        %v1009 = vpop.f32.mrb[0].mxu0
        %v1010 = vadd.f32 0.0, %v1009
        %1011 = vmatprep.mubr.bf16.mxu0 %v463
        %1012 = vmatmul.mubr.bf16.gmra.mrb[0].mxu0 %v462
        %v1013 = vpop.f32.mrb[0].mxu0
        %v1014 = vadd.f32 0.0, %v1013
        %v1015 = vpop.f32.mrb[0].mxu0
        %v1016 = vadd.f32 0.0, %v1015
        %v1017 = vpop.f32.mrb[0].mxu0
        %v1018 = vadd.f32 0.0, %v1017
        %v1019 = vpop.f32.mrb[0].mxu0
        %v1020 = vadd.f32 0.0, %v1019
        %1021 = vmatprep.mubr.bf16.mxu0 %v464
        %1022 = vmatmul.mubr.bf16.gmra.mrb[0].mxu0 %v463
        %v1023 = vpop.f32.mrb[0].mxu0
        %v1024 = vadd.f32 0.0, %v1023
        %v1025 = vpop.f32.mrb[0].mxu0
        %v1026 = vadd.f32 0.0, %v1025
        %v1027 = vpop.f32.mrb[0].mxu0
        %v1028 = vadd.f32 0.0, %v1027
        %v1029 = vpop.f32.mrb[0].mxu0
        %v1030 = vadd.f32 0.0, %v1029
        %1031 = vmatprep.mubr.bf16.mxu0 %v465
        %1032 = vmatmul.mubr.bf16.gmra.mrb[0].mxu0 %v464
        %v1033 = vpop.f32.mrb[0].mxu0
        %v1034 = vadd.f32 0.0, %v1033
        %v1035 = vpop.f32.mrb[0].mxu0
        %v1036 = vadd.f32 0.0, %v1035
        %v1037 = vpop.f32.mrb[0].mxu0
        %v1038 = vadd.f32 0.0, %v1037
        %v1039 = vpop.f32.mrb[0].mxu0
        %v1040 = vadd.f32 0.0, %v1039
        %1041 = vmatprep.mubr.bf16.mxu0 %v466
        %1042 = vmatmul.mubr.bf16.gmra.mrb[0].mxu0 %v465
        %v1043 = vpop.f32.mrb[0].mxu0
        %v1044 = vadd.f32 0.0, %v1043
        %v1045 = vpop.f32.mrb[0].mxu0
        %v1046 = vadd.f32 0.0, %v1045
        %v1047 = vpop.f32.mrb[0].mxu0
        %v1048 = vadd.f32 0.0, %v1047
        %v1049 = vpop.f32.mrb[0].mxu0
        %v1050 = vadd.f32 0.0, %v1049
        %1051 = vmatprep.mubr.bf16.mxu0 %v467
        %1052 = vmatmul.mubr.bf16.gmra.mrb[0].mxu0 %v466
        %v1053 = vpop.f32.mrb[0].mxu0
        %v1054 = vadd.f32 0.0, %v1053
        %v1055 = vpop.f32.mrb[0].mxu0
        %v1056 = vadd.f32 0.0, %v1055
        %v1057 = vpop.f32.mrb[0].mxu0
        %v1058 = vadd.f32 0.0, %v1057
        %v1059 = vpop.f32.mrb[0].mxu0
        %v1060 = vadd.f32 0.0, %v1059
        %1061 = vmatprep.mubr.bf16.mxu0 %v468
        %1062 = vmatmul.mubr.bf16.gmra.mrb[0].mxu0 %v467
        %v1063 = vpop.f32.mrb[0].mxu0
        %v1064 = vadd.f32 0.0, %v1063
        %v1065 = vpop.f32.mrb[0].mxu0
        %v1066 = vadd.f32 0.0, %v1065
        %v1067 = vpop.f32.mrb[0].mxu0
        %v1068 = vadd.f32 0.0, %v1067
        %v1069 = vpop.f32.mrb[0].mxu0
        %v1070 = vadd.f32 0.0, %v1069
        %1071 = vmatprep.mubr.bf16.mxu0 %v481
        %1072 = vmatmul.mubr.bf16.gmra.mrb[0].mxu0 %v468
        %v1073 = vpop.f32.mrb[0].mxu0
        %v1074 = vadd.f32 0.0, %v1073
        %v1075 = vpop.f32.mrb[0].mxu0
        %v1076 = vadd.f32 0.0, %v1075
        %v1077 = vpop.f32.mrb[0].mxu0
        %v1078 = vadd.f32 0.0, %v1077
        %v1079 = vpop.f32.mrb[0].mxu0
        %v1080 = vadd.f32 0.0, %v1079
        %1081 = vdwg.mxu0
        %1082 = vmatprep.subr.bf16.mxu0 %v874
        %1083 = vmatpush1.bf16.msra.mxu0 %v873
        %1084 = vmatprep.subr.bf16.mxu0 %v877
        %1085 = vmatpush1.bf16.msra.mxu0 %v876
        %1086 = vmatprep.subr.bf16.mxu0 %v880
        %1087 = vmatpush1.bf16.msra.mxu0 %v879
        %1088 = vmatprep.subr.bf16.mxu0 %v883
        %1089 = vmatpush1.bf16.msra.mxu0 %v882
        %1090 = vmatprep.subr.bf16.mxu0 %v886
        %1091 = vmatpush1.bf16.msra.mxu0 %v885
        %1092 = vmatprep.subr.bf16.mxu0 %v889
        %1093 = vmatpush1.bf16.msra.mxu0 %v888
        %1094 = vmatprep.subr.bf16.mxu0 %v892
        %1095 = vmatpush1.bf16.msra.mxu0 %v891
        %1096 = vmatprep.subr.bf16.mxu0 %v895
        %1097 = vmatpush1.bf16.msra.mxu0 %v894
        %1098 = vmatprep.subr.bf16.mxu0 0
        %1099 = vmatpush1.bf16.msra.mxu0 0
        %1100 = vmatprep.subr.bf16.mxu0 0
        %1101 = vmatpush1.bf16.msra.mxu0 0
        %1102 = vmatprep.subr.bf16.mxu0 0
        %1103 = vmatpush1.bf16.msra.mxu0 0
        %1104 = vmatprep.subr.bf16.mxu0 0
        %1105 = vmatpush1.bf16.msra.mxu0 0
        %1106 = vmatprep.subr.bf16.mxu0 0
        %1107 = vmatpush1.bf16.msra.mxu0 0
        %1108 = vmatprep.subr.bf16.mxu0 0
        %1109 = vmatpush1.bf16.msra.mxu0 0
        %1110 = vmatprep.subr.bf16.mxu0 0
        %1111 = vmatpush1.bf16.msra.mxu0 0
        %1112 = vmatprep.subr.bf16.mxu0 0
        %1113 = vmatpush1.bf16.msra.mxu0 0
        %1114 = vmatprep.mubr.bf16.mxu0 0
        %1115 = vmatmul.mubr.bf16.gmra.mrb[0].mxu0 %v463
        %v1116 = vpop.f32.mrb[0].mxu0
        %v1117 = vadd.f32 %v1004, %v1116
        %v1118 = vpop.f32.mrb[0].mxu0
        %v1119 = vadd.f32 %v1006, %v1118
        %v1120 = vpop.f32.mrb[0].mxu0
        %v1121 = vadd.f32 %v1008, %v1120
        %v1122 = vpop.f32.mrb[0].mxu0
        %v1123 = vadd.f32 %v1010, %v1122
        %1124 = vmatprep.mubr.bf16.mxu0 0
        %1125 = vmatmul.mubr.bf16.gmra.mrb[0].mxu0 %v464
        %v1126 = vpop.f32.mrb[0].mxu0
        %v1127 = vadd.f32 %v1014, %v1126
        %v1128 = vpop.f32.mrb[0].mxu0
        %v1129 = vadd.f32 %v1016, %v1128
        %v1130 = vpop.f32.mrb[0].mxu0
        %v1131 = vadd.f32 %v1018, %v1130
        %v1132 = vpop.f32.mrb[0].mxu0
        %v1133 = vadd.f32 %v1020, %v1132
        %1134 = vmatprep.mubr.bf16.mxu0 0
        %1135 = vmatmul.mubr.bf16.gmra.mrb[0].mxu0 %v465
        %v1136 = vpop.f32.mrb[0].mxu0
        %v1137 = vadd.f32 %v1024, %v1136
        %v1138 = vpop.f32.mrb[0].mxu0
        %v1139 = vadd.f32 %v1026, %v1138
        %v1140 = vpop.f32.mrb[0].mxu0
        %v1141 = vadd.f32 %v1028, %v1140
        %v1142 = vpop.f32.mrb[0].mxu0
        %v1143 = vadd.f32 %v1030, %v1142
        %1144 = vmatprep.mubr.bf16.mxu0 0
        %1145 = vmatmul.mubr.bf16.gmra.mrb[0].mxu0 %v466
        %v1146 = vpop.f32.mrb[0].mxu0
        %v1147 = vadd.f32 %v1034, %v1146
        %v1148 = vpop.f32.mrb[0].mxu0
        %v1149 = vadd.f32 %v1036, %v1148
        %v1150 = vpop.f32.mrb[0].mxu0
        %v1151 = vadd.f32 %v1038, %v1150
        %v1152 = vpop.f32.mrb[0].mxu0
        %v1153 = vadd.f32 %v1040, %v1152
        %1154 = vmatprep.mubr.bf16.mxu0 0
        %1155 = vmatmul.mubr.bf16.gmra.mrb[0].mxu0 %v467
        %v1156 = vpop.f32.mrb[0].mxu0
        %v1157 = vadd.f32 %v1044, %v1156
        %v1158 = vpop.f32.mrb[0].mxu0
        %v1159 = vadd.f32 %v1046, %v1158
        %v1160 = vpop.f32.mrb[0].mxu0
        %v1161 = vadd.f32 %v1048, %v1160
        %v1162 = vpop.f32.mrb[0].mxu0
        %v1163 = vadd.f32 %v1050, %v1162
        %1164 = vmatprep.mubr.bf16.mxu0 0
        %1165 = vmatmul.mubr.bf16.gmra.mrb[0].mxu0 %v468
        %v1166 = vpop.f32.mrb[0].mxu0
        %v1167 = vadd.f32 %v1054, %v1166
        %v1168 = vpop.f32.mrb[0].mxu0
        %v1169 = vadd.f32 %v1056, %v1168
        %v1170 = vpop.f32.mrb[0].mxu0
        %v1171 = vadd.f32 %v1058, %v1170
        %v1172 = vpop.f32.mrb[0].mxu0
        %v1173 = vadd.f32 %v1060, %v1172
        %1174 = vmatprep.mubr.bf16.mxu0 0
        %1175 = vmatmul.mubr.bf16.gmra.mrb[0].mxu0 %v481
        %v1176 = vpop.f32.mrb[0].mxu0
        %v1177 = vadd.f32 %v1064, %v1176
        %v1178 = vpop.f32.mrb[0].mxu0
        %v1179 = vadd.f32 %v1066, %v1178
        %v1180 = vpop.f32.mrb[0].mxu0
        %v1181 = vadd.f32 %v1068, %v1180
        %v1182 = vpop.f32.mrb[0].mxu0
        %v1183 = vadd.f32 %v1070, %v1182
        %1184 = vmatprep.mubr.bf16.mxu0 0
        %1185 = vmatmul.mubr.bf16.gmra.mrb[0].mxu0 %v487
        %v1186 = vpop.f32.mrb[0].mxu0
        %v1187 = vadd.f32 %v1074, %v1186
        %v1188 = vpop.f32.mrb[0].mxu0
        %v1189 = vadd.f32 %v1076, %v1188
        %v1190 = vpop.f32.mrb[0].mxu0
        %v1191 = vadd.f32 %v1078, %v1190
        %v1192 = vpop.f32.mrb[0].mxu0
        %v1193 = vadd.f32 %v1080, %v1192
        %1194 = vdwg.mxu0
        %1195 = vmatprep.subr.bf16.mxu0 0
        %1196 = vmatpush1.bf16.msra.mxu0 %v827
        %1197 = vmatprep.subr.bf16.mxu0 0
        %1198 = vmatpush1.bf16.msra.mxu0 %v830
        %1199 = vmatprep.subr.bf16.mxu0 0
        %1200 = vmatpush1.bf16.msra.mxu0 %v833
        %1201 = vmatprep.subr.bf16.mxu0 0
        %1202 = vmatpush1.bf16.msra.mxu0 %v836
        %1203 = vmatprep.subr.bf16.mxu0 0
        %1204 = vmatpush1.bf16.msra.mxu0 %v839
        %1205 = vmatprep.subr.bf16.mxu0 0
        %1206 = vmatpush1.bf16.msra.mxu0 %v842
        %1207 = vmatprep.subr.bf16.mxu0 0
        %1208 = vmatpush1.bf16.msra.mxu0 %v845
        %1209 = vmatprep.subr.bf16.mxu0 0
        %1210 = vmatpush1.bf16.msra.mxu0 %v848
        %1211 = vmatprep.subr.bf16.mxu0 0
        %1212 = vmatpush1.bf16.msra.mxu0 %v851
        %1213 = vmatprep.subr.bf16.mxu0 0
        %1214 = vmatpush1.bf16.msra.mxu0 %v854
        %1215 = vmatprep.subr.bf16.mxu0 0
        %1216 = vmatpush1.bf16.msra.mxu0 %v857
        %1217 = vmatprep.subr.bf16.mxu0 0
        %1218 = vmatpush1.bf16.msra.mxu0 %v860
        %1219 = vmatprep.subr.bf16.mxu0 0
        %1220 = vmatpush1.bf16.msra.mxu0 %v863
        %1221 = vmatprep.subr.bf16.mxu0 0
        %1222 = vmatpush1.bf16.msra.mxu0 %v866
        %1223 = vmatprep.subr.bf16.mxu0 0
        %1224 = vmatpush1.bf16.msra.mxu0 %v869
        %1225 = vmatprep.subr.bf16.mxu0 0
        %1226 = vmatpush1.bf16.msra.mxu0 %v872
        %1227 = vmatprep.mubr.bf16.mxu0 %v462
        %1228 = vmatmul.mubr.bf16.gmra.mrb[0].mxu0 %v461
        %v1229 = vpop.f32.mrb[0].mxu0
        %v1230 = vadd.f32 0.0, %v1229
        %v1231 = vpop.f32.mrb[0].mxu0
        %v1232 = vpop.f32.mrb[0].mxu0
        %v1233 = vadd.f32 0.0, %v1232
        %v1234 = vpop.f32.mrb[0].mxu0
        %1235 = vmatprep.mubr.bf16.mxu0 %v463
        %1236 = vmatmul.mubr.bf16.gmra.mrb[0].mxu0 %v462
        %v1237 = vpop.f32.mrb[0].mxu0
        %v1238 = vadd.f32 0.0, %v1237
        %v1239 = vpop.f32.mrb[0].mxu0
        %v1240 = vpop.f32.mrb[0].mxu0
        %v1241 = vadd.f32 0.0, %v1240
        %v1242 = vpop.f32.mrb[0].mxu0
        %1243 = vmatprep.mubr.bf16.mxu0 %v464
        %1244 = vmatmul.mubr.bf16.gmra.mrb[0].mxu0 %v463
        %v1245 = vpop.f32.mrb[0].mxu0
        %v1246 = vadd.f32 0.0, %v1245
        %v1247 = vpop.f32.mrb[0].mxu0
        %v1248 = vpop.f32.mrb[0].mxu0
        %v1249 = vadd.f32 0.0, %v1248
        %v1250 = vpop.f32.mrb[0].mxu0
        %1251 = vmatprep.mubr.bf16.mxu0 %v465
        %1252 = vmatmul.mubr.bf16.gmra.mrb[0].mxu0 %v464
        %v1253 = vpop.f32.mrb[0].mxu0
        %v1254 = vadd.f32 0.0, %v1253
        %v1255 = vpop.f32.mrb[0].mxu0
        %v1256 = vpop.f32.mrb[0].mxu0
        %v1257 = vadd.f32 0.0, %v1256
        %v1258 = vpop.f32.mrb[0].mxu0
        %1259 = vmatprep.mubr.bf16.mxu0 %v466
        %1260 = vmatmul.mubr.bf16.gmra.mrb[0].mxu0 %v465
        %v1261 = vpop.f32.mrb[0].mxu0
        %v1262 = vadd.f32 0.0, %v1261
        %v1263 = vpop.f32.mrb[0].mxu0
        %v1264 = vpop.f32.mrb[0].mxu0
        %v1265 = vadd.f32 0.0, %v1264
        %v1266 = vpop.f32.mrb[0].mxu0
        %1267 = vmatprep.mubr.bf16.mxu0 %v467
        %1268 = vmatmul.mubr.bf16.gmra.mrb[0].mxu0 %v466
        %v1269 = vpop.f32.mrb[0].mxu0
        %v1270 = vadd.f32 0.0, %v1269
        %v1271 = vpop.f32.mrb[0].mxu0
        %v1272 = vpop.f32.mrb[0].mxu0
        %v1273 = vadd.f32 0.0, %v1272
        %v1274 = vpop.f32.mrb[0].mxu0
        %1275 = vmatprep.mubr.bf16.mxu0 %v468
        %1276 = vmatmul.mubr.bf16.gmra.mrb[0].mxu0 %v467
        %v1277 = vpop.f32.mrb[0].mxu0
        %v1278 = vadd.f32 0.0, %v1277
        %v1279 = vpop.f32.mrb[0].mxu0
        %v1280 = vpop.f32.mrb[0].mxu0
        %v1281 = vadd.f32 0.0, %v1280
        %v1282 = vpop.f32.mrb[0].mxu0
        %1283 = vmatprep.mubr.bf16.mxu0 %v481
        %1284 = vmatmul.mubr.bf16.gmra.mrb[0].mxu0 %v468
        %v1285 = vpop.f32.mrb[0].mxu0
        %v1286 = vadd.f32 0.0, %v1285
        %v1287 = vpop.f32.mrb[0].mxu0
        %v1288 = vpop.f32.mrb[0].mxu0
        %v1289 = vadd.f32 0.0, %v1288
        %v1290 = vpop.f32.mrb[0].mxu0
        %1291 = vdwg.mxu0
        %1292 = vmatprep.subr.bf16.mxu0 0
        %1293 = vmatpush1.bf16.msra.mxu0 %v875
        %1294 = vmatprep.subr.bf16.mxu0 0
        %1295 = vmatpush1.bf16.msra.mxu0 %v878
        %1296 = vmatprep.subr.bf16.mxu0 0
        %1297 = vmatpush1.bf16.msra.mxu0 %v881
        %1298 = vmatprep.subr.bf16.mxu0 0
        %1299 = vmatpush1.bf16.msra.mxu0 %v884
        %1300 = vmatprep.subr.bf16.mxu0 0
        %1301 = vmatpush1.bf16.msra.mxu0 %v887
        %1302 = vmatprep.subr.bf16.mxu0 0
        %1303 = vmatpush1.bf16.msra.mxu0 %v890
        %1304 = vmatprep.subr.bf16.mxu0 0
        %1305 = vmatpush1.bf16.msra.mxu0 %v893
        %1306 = vmatprep.subr.bf16.mxu0 0
        %1307 = vmatpush1.bf16.msra.mxu0 %v896
        %1308 = vmatprep.subr.bf16.mxu0 0
        %1309 = vmatpush1.bf16.msra.mxu0 0
        %1310 = vmatprep.subr.bf16.mxu0 0
        %1311 = vmatpush1.bf16.msra.mxu0 0
        %1312 = vmatprep.subr.bf16.mxu0 0
        %1313 = vmatpush1.bf16.msra.mxu0 0
        %1314 = vmatprep.subr.bf16.mxu0 0
        %1315 = vmatpush1.bf16.msra.mxu0 0
        %1316 = vmatprep.subr.bf16.mxu0 0
        %1317 = vmatpush1.bf16.msra.mxu0 0
        %1318 = vmatprep.subr.bf16.mxu0 0
        %1319 = vmatpush1.bf16.msra.mxu0 0
        %1320 = vmatprep.subr.bf16.mxu0 0
        %1321 = vmatpush1.bf16.msra.mxu0 0
        %1322 = vmatprep.subr.bf16.mxu0 0
        %1323 = vmatpush1.bf16.msra.mxu0 0
        %1324 = vmatprep.mubr.bf16.mxu0 0
        %1325 = vmatmul.mubr.bf16.gmra.mrb[0].mxu0 %v463
        %v1326 = vpop.f32.mrb[0].mxu0
        %v1327 = vadd.f32 %v1230, %v1326
        %v1328 = vpop.f32.mrb[0].mxu0
        %v1329 = vpop.f32.mrb[0].mxu0
        %v1330 = vadd.f32 %v1233, %v1329
        %v1331 = vpop.f32.mrb[0].mxu0
        %1332 = vmatprep.mubr.bf16.mxu0 0
        %1333 = vmatmul.mubr.bf16.gmra.mrb[0].mxu0 %v464
        %v1334 = vpop.f32.mrb[0].mxu0
        %v1335 = vadd.f32 %v1238, %v1334
        %v1336 = vpop.f32.mrb[0].mxu0
        %v1337 = vpop.f32.mrb[0].mxu0
        %v1338 = vadd.f32 %v1241, %v1337
        %v1339 = vpop.f32.mrb[0].mxu0
        %1340 = vmatprep.mubr.bf16.mxu0 0
        %1341 = vmatmul.mubr.bf16.gmra.mrb[0].mxu0 %v465
        %v1342 = vpop.f32.mrb[0].mxu0
        %v1343 = vadd.f32 %v1246, %v1342
        %v1344 = vpop.f32.mrb[0].mxu0
        %v1345 = vpop.f32.mrb[0].mxu0
        %v1346 = vadd.f32 %v1249, %v1345
        %v1347 = vpop.f32.mrb[0].mxu0
        %1348 = vmatprep.mubr.bf16.mxu0 0
        %1349 = vmatmul.mubr.bf16.gmra.mrb[0].mxu0 %v466
        %v1350 = vpop.f32.mrb[0].mxu0
        %v1351 = vadd.f32 %v1254, %v1350
        %v1352 = vpop.f32.mrb[0].mxu0
        %v1353 = vpop.f32.mrb[0].mxu0
        %v1354 = vadd.f32 %v1257, %v1353
        %v1355 = vpop.f32.mrb[0].mxu0
        %1356 = vmatprep.mubr.bf16.mxu0 0
        %1357 = vmatmul.mubr.bf16.gmra.mrb[0].mxu0 %v467
        %v1358 = vpop.f32.mrb[0].mxu0
        %v1359 = vadd.f32 %v1262, %v1358
        %v1360 = vpop.f32.mrb[0].mxu0
        %v1361 = vpop.f32.mrb[0].mxu0
        %v1362 = vadd.f32 %v1265, %v1361
        %v1363 = vpop.f32.mrb[0].mxu0
        %1364 = vmatprep.mubr.bf16.mxu0 0
        %1365 = vmatmul.mubr.bf16.gmra.mrb[0].mxu0 %v468
        %v1366 = vpop.f32.mrb[0].mxu0
        %v1367 = vadd.f32 %v1270, %v1366
        %v1368 = vpop.f32.mrb[0].mxu0
        %v1369 = vpop.f32.mrb[0].mxu0
        %v1370 = vadd.f32 %v1273, %v1369
        %v1371 = vpop.f32.mrb[0].mxu0
        %1372 = vmatprep.mubr.bf16.mxu0 0
        %1373 = vmatmul.mubr.bf16.gmra.mrb[0].mxu0 %v481
        %v1374 = vpop.f32.mrb[0].mxu0
        %v1375 = vadd.f32 %v1278, %v1374
        %v1376 = vpop.f32.mrb[0].mxu0
        %v1377 = vpop.f32.mrb[0].mxu0
        %v1378 = vadd.f32 %v1281, %v1377
        %v1379 = vpop.f32.mrb[0].mxu0
        %1380 = vmatprep.mubr.bf16.mxu0 0
        %1381 = vmatmul.mubr.bf16.gmra.mrb[0].mxu0 %v487
        %v1382 = vpop.f32.mrb[0].mxu0
        %v1383 = vadd.f32 %v1286, %v1382
        %v1384 = vpop.f32.mrb[0].mxu0
        %v1385 = vpop.f32.mrb[0].mxu0
        %v1386 = vadd.f32 %v1289, %v1385
        %v1387 = vpop.f32.mrb[0].mxu0
        %1388 = vdwg.mxu0
        %v1389 = vld [vmem:[%s4] sm:$0x1]
        %v1391 = vlaneseq
        %v1392 = vshrl.u32 %v1391, 7
        %v1393 = vsub.s32 0, %v1392
        %v1394 = vrot.slane %v1389, %v1393
        %v1396 = vadd.f32 %v1119, %v1394
        %v1397 = vadd.f32 %v1123, %v1394
        %v1398 = vadd.f32 %v1129, %v1394
        %v1399 = vadd.f32 %v1133, %v1394
        %v1400 = vadd.f32 %v1139, %v1394
        %v1401 = vadd.f32 %v1143, %v1394
        %v1402 = vadd.f32 %v1149, %v1394
        %v1403 = vadd.f32 %v1153, %v1394
        %v1404 = vadd.f32 %v1159, %v1394
        %v1405 = vadd.f32 %v1163, %v1394
        %v1406 = vadd.f32 %v1169, %v1394
        %v1407 = vadd.f32 %v1173, %v1394
        %v1408 = vadd.f32 %v1179, %v1394
        %v1409 = vadd.f32 %v1183, %v1394
        %v1410 = vadd.f32 %v1189, %v1394
        %v1411 = vadd.f32 %v1193, %v1394
        %vm1428 = vcmask 1040384
        %v1429 = vrot.slane %v1117, 7
        %v1430 = vrot.slane %v1121, 7
        %v1431 = vsel %vm1428, %v1429, %v1430
        %v1432 = vrot.slane %v1127, 7
        %v1433 = vrot.slane %v1131, 7
        %v1434 = vsel %vm1428, %v1432, %v1433
        %v1435 = vrot.slane %v1137, 7
        %v1436 = vrot.slane %v1141, 7
        %v1437 = vsel %vm1428, %v1435, %v1436
        %v1438 = vrot.slane %v1147, 7
        %v1439 = vrot.slane %v1151, 7
        %v1440 = vsel %vm1428, %v1438, %v1439
        %v1441 = vrot.slane %v1157, 7
        %v1442 = vrot.slane %v1161, 7
        %v1443 = vsel %vm1428, %v1441, %v1442
        %v1444 = vrot.slane %v1167, 7
        %v1445 = vrot.slane %v1171, 7
        %v1446 = vsel %vm1428, %v1444, %v1445
        %v1447 = vrot.slane %v1177, 7
        %v1448 = vrot.slane %v1181, 7
        %v1449 = vsel %vm1428, %v1447, %v1448
        %v1450 = vrot.slane %v1187, 7
        %v1451 = vrot.slane %v1191, 7
        %v1452 = vsel %vm1428, %v1450, %v1451
        %v1469 = vsel %vm1428, 0.0, %v1429
        %v1470 = vsel %vm1428, 0.0, %v1432
        %v1471 = vsel %vm1428, 0.0, %v1435
        %v1472 = vsel %vm1428, 0.0, %v1438
        %v1473 = vsel %vm1428, 0.0, %v1441
        %v1474 = vsel %vm1428, 0.0, %v1444
        %v1475 = vsel %vm1428, 0.0, %v1447
        %v1476 = vsel %vm1428, 0.0, %v1450
        %v1477 = vadd.f32 %v1396, %v1469
        %v1478 = vadd.f32 %v1397, %v1431
        %v1479 = vadd.f32 %v1398, %v1470
        %v1480 = vadd.f32 %v1399, %v1434
        %v1481 = vadd.f32 %v1400, %v1471
        %v1482 = vadd.f32 %v1401, %v1437
        %v1483 = vadd.f32 %v1402, %v1472
        %v1484 = vadd.f32 %v1403, %v1440
        %v1485 = vadd.f32 %v1404, %v1473
        %v1486 = vadd.f32 %v1405, %v1443
        %v1487 = vadd.f32 %v1406, %v1474
        %v1488 = vadd.f32 %v1407, %v1446
        %v1489 = vadd.f32 %v1408, %v1475
        %v1490 = vadd.f32 %v1409, %v1449
        %v1491 = vadd.f32 %v1410, %v1476
        %v1492 = vadd.f32 %v1411, %v1452
        %vm1509 = vcmask 1046528
        %v1510 = vrot.slane %v1327, 1
        %v1511 = vrot.slane %v1330, 1
        %v1512 = vsel %vm1509, %v1510, %v1511
        %v1513 = vrot.slane %v1335, 1
        %v1514 = vrot.slane %v1338, 1
        %v1515 = vsel %vm1509, %v1513, %v1514
        %v1516 = vrot.slane %v1343, 1
        %v1517 = vrot.slane %v1346, 1
        %v1518 = vsel %vm1509, %v1516, %v1517
        %v1519 = vrot.slane %v1351, 1
        %v1520 = vrot.slane %v1354, 1
        %v1521 = vsel %vm1509, %v1519, %v1520
        %v1522 = vrot.slane %v1359, 1
        %v1523 = vrot.slane %v1362, 1
        %v1524 = vsel %vm1509, %v1522, %v1523
        %v1525 = vrot.slane %v1367, 1
        %v1526 = vrot.slane %v1370, 1
        %v1527 = vsel %vm1509, %v1525, %v1526
        %v1528 = vrot.slane %v1375, 1
        %v1529 = vrot.slane %v1378, 1
        %v1530 = vsel %vm1509, %v1528, %v1529
        %v1531 = vrot.slane %v1383, 1
        %v1532 = vrot.slane %v1386, 1
        %v1533 = vsel %vm1509, %v1531, %v1532
        %v1550 = vsel %vm1509, %v1511, 0.0
        %v1551 = vsel %vm1509, %v1514, 0.0
        %v1552 = vsel %vm1509, %v1517, 0.0
        %v1553 = vsel %vm1509, %v1520, 0.0
        %v1554 = vsel %vm1509, %v1523, 0.0
        %v1555 = vsel %vm1509, %v1526, 0.0
        %v1556 = vsel %vm1509, %v1529, 0.0
        %v1557 = vsel %vm1509, %v1532, 0.0
        %v1558 = vadd.f32 %v1477, %v1512
        %v1559 = vadd.f32 %v1478, %v1550
        %v1560 = vadd.f32 %v1479, %v1515
        %v1561 = vadd.f32 %v1480, %v1551
        %v1562 = vadd.f32 %v1481, %v1518
        %v1563 = vadd.f32 %v1482, %v1552
        %v1564 = vadd.f32 %v1483, %v1521
        %v1565 = vadd.f32 %v1484, %v1553
        %v1566 = vadd.f32 %v1485, %v1524
        %v1567 = vadd.f32 %v1486, %v1554
        %v1568 = vadd.f32 %v1487, %v1527
        %v1569 = vadd.f32 %v1488, %v1555
        %v1570 = vadd.f32 %v1489, %v1530
        %v1571 = vadd.f32 %v1490, %v1556
        %v1572 = vadd.f32 %v1491, %v1533
        %v1573 = vadd.f32 %v1492, %v1557
        %v1574 = vmax.f32 %v1558, 0.0
        %v1575 = vmax.f32 %v1559, 0.0
        %v1576 = vmax.f32 %v1560, 0.0
        %v1577 = vmax.f32 %v1561, 0.0
        %v1578 = vmax.f32 %v1562, 0.0
        %v1579 = vmax.f32 %v1563, 0.0
        %v1580 = vmax.f32 %v1564, 0.0
        %v1581 = vmax.f32 %v1565, 0.0
        %v1582 = vmax.f32 %v1566, 0.0
        %v1583 = vmax.f32 %v1567, 0.0
        %v1584 = vmax.f32 %v1568, 0.0
        %v1585 = vmax.f32 %v1569, 0.0
        %v1586 = vmax.f32 %v1570, 0.0
        %v1587 = vmax.f32 %v1571, 0.0
        %v1588 = vmax.f32 %v1572, 0.0
        %v1589 = vmax.f32 %v1573, 0.0
        %v1590 = vpack.c.bf16 %v1575, %v1574
        %v1591 = vpack.c.bf16 %v1577, %v1576
        %v1592 = vpack.c.bf16 %v1579, %v1578
        %v1593 = vpack.c.bf16 %v1581, %v1580
        %v1594 = vpack.c.bf16 %v1583, %v1582
        %v1595 = vpack.c.bf16 %v1585, %v1584
        %v1596 = vpack.c.bf16 %v1587, %v1586
        %v1597 = vpack.c.bf16 %v1589, %v1588
        %v1606 = vunpack.c.l.b16 %v1590
        %v1607 = vunpack.c.h.b16 %v1590
        %v1608 = vunpack.c.l.b16 %v1591
        %v1609 = vunpack.c.h.b16 %v1591
        %v1610 = vunpack.c.l.b16 %v1592
        %v1611 = vunpack.c.h.b16 %v1592
        %v1612 = vunpack.c.l.b16 %v1593
        %v1613 = vunpack.c.h.b16 %v1593
        %v1614 = vunpack.c.l.b16 %v1594
        %v1615 = vunpack.c.h.b16 %v1594
        %v1616 = vunpack.c.l.b16 %v1595
        %v1617 = vunpack.c.h.b16 %v1595
        %v1618 = vunpack.c.l.b16 %v1596
        %v1619 = vunpack.c.h.b16 %v1596
        %v1620 = vunpack.c.l.b16 %v1597
        %v1621 = vunpack.c.h.b16 %v1597
        %v1622 = vpack.c.b16 %v1606, %v1606
        %v1623 = vpack.c.b16 %v1607, %v1607
        %v1624 = vpack.c.b16 %v1608, %v1608
        %v1625 = vpack.c.b16 %v1609, %v1609
        %v1626 = vpack.c.b16 %v1610, %v1610
        %v1627 = vpack.c.b16 %v1611, %v1611
        %v1628 = vpack.c.b16 %v1612, %v1612
        %v1629 = vpack.c.b16 %v1613, %v1613
        %v1630 = vpack.c.b16 %v1614, %v1614
        %v1631 = vpack.c.b16 %v1615, %v1615
        %v1632 = vpack.c.b16 %v1616, %v1616
        %v1633 = vpack.c.b16 %v1617, %v1617
        %v1634 = vpack.c.b16 %v1618, %v1618
        %v1635 = vpack.c.b16 %v1619, %v1619
        %v1636 = vpack.c.b16 %v1620, %v1620
        %v1637 = vpack.c.b16 %v1621, %v1621
        %1654 = vst [vmem:[%s385] sm:$0xf] %v1622
        %1655 = vst [vmem:[%s385 + $0x4] sm:$0xf] %v1623
        %1656 = vst [vmem:[%s385 + $0x8] sm:$0xf] %v1624
        %1657 = vst [vmem:[%s385 + $0xc] sm:$0xf] %v1625
        %1658 = vst [vmem:[%s385 + $0x10] sm:$0xf] %v1626
        %1659 = vst [vmem:[%s385 + $0x14] sm:$0xf] %v1627
        %1660 = vst [vmem:[%s385 + $0x18] sm:$0xf] %v1628
        %1661 = vst [vmem:[%s385 + $0x1c] sm:$0xf] %v1629
        %1662 = vst [vmem:[%s385 + $0x20] sm:$0xf] %v1630
        %1663 = vst [vmem:[%s385 + $0x24] sm:$0xf] %v1631
        %1664 = vst [vmem:[%s385 + $0x28] sm:$0xf] %v1632
        %1665 = vst [vmem:[%s385 + $0x2c] sm:$0xf] %v1633
        %1666 = vst [vmem:[%s385 + $0x30] sm:$0xf] %v1634
        %1667 = vst [vmem:[%s385 + $0x34] sm:$0xf] %v1635
        %1668 = vst [vmem:[%s385 + $0x38] sm:$0xf] %v1636
        %1669 = vst [vmem:[%s385 + $0x3c] sm:$0xf] %v1637
        %s1670 = sand.u32 %s190, 1
        %s1671 = scalar_lea.sflag [#allocation4], %s1670
        %s1672 = sand.u32 %s190, 1
        %s1673 = smul.addr %s1672, 64
        %s1674 = scalar_lea.vmem [#allocation10], %s1673
        // Predicated region
        $region57: #{tpu_custom_call.1} parent=39 // pred_check
          %p1675 = pneg %p200
        $region58: #{tpu_custom_call.1} parent=39 // pred_check_branch
          %1677 = sbr.rel (%p1675) target = $region60
        $region59: #{tpu_custom_call.1} parent=39 // pred_region
          %s1678 = smul.u32 8, %s31
          %s1680 = ssub.s32 1024, 1024
          %1681 = vsyncadd %s1671, %s1680
          %s1682 = smul.addr %s1678, 2
          %s1683 = smul.addr %s30, 32
          %s1684 = sadd.s32 %s1682, %s1683
          %s1685 = smul.addr %s1684, 64
          %s1686 = scalar_lea.hbm %s5, %s1685
          %s1687 = sshll.u32 %s1674, 4
          %s1688 = int_to_ptr.vmem [resolvable:$true] %s1687
          %1693 = dma.vmem_to_hbm [thread:$0]  %s1688, 1024, %s1686, %s1671, 64, 64, 4
        $region60: #{tpu_custom_call.1} parent=39 // pred_fallthru
          _
      $region40: #{tpu_custom_call.1} parent=5 // pred_fallthru
        _
      %p1694 = scmp.le.s32.totalorder 2, %s21
      // Predicated region
      $region61: #{tpu_custom_call.1} parent=5 // pred_check
        %p1695 = pneg %p1694
      $region62: #{tpu_custom_call.1} parent=5 // pred_check_branch
        %1697 = sbr.rel (%p1695) target = $region64
      $region63: #{tpu_custom_call.1} parent=5 // pred_region
        %s1698 = ssub.s32 %s21, 2
        // Predicated region
        $region65: #{tpu_custom_call.1} parent=63 // pred_check
          %p1699 = pneg %p206
        $region66: #{tpu_custom_call.1} parent=63 // pred_check_branch
          %1701 = sbr.rel (%p1699) target = $region68
        $region67: #{tpu_custom_call.1} parent=63 // pred_region
          %s1702 = sand.u32 %s191, 1
          %s1703 = scalar_lea.sflag [#allocation4], %s1702
          %s1704 = sand.u32 %s191, 1
          %s1705 = smul.addr %s1704, 64
          %s1706 = scalar_lea.vmem [#allocation10], %s1705
          %1707 = dma.done %s1703, 1024
        $region68: #{tpu_custom_call.1} parent=63 // pred_fallthru
          _
      $region64: #{tpu_custom_call.1} parent=5 // pred_fallthru
        _
    $region6: #{tpu_custom_call.1} parent=1 // loop_footer
      %s25 = sadd.s32 1, %s21
    $region7: #{tpu_custom_call.1} parent=1 // loop_footer_branch
      %20 = sbr.rel target = $region3
    $region8: #{tpu_custom_call.1} parent=1 // loop_exit
      _
    %1708 = vsyncpa [#allocation3], 1
    %s1709 = scalar_lea.sflag [#allocation3], 1
    %1710 = vsyncpa %s1709, 1
    %1711 = vsyncpa [#allocation6], 1
    %s1712 = scalar_lea.sflag [#allocation6], 1
    %1713 = vsyncpa %s1712, 1
    %1714 = vsyncpa [#allocation9], 1
    %1715 = vsyncpa [#allocation4], 1
    %s1716 = scalar_lea.sflag [#allocation4], 1
    %1717 = vsyncpa %s1716, 1

</llo_original>
